<compile_context>
chip_gen: v7x
topology: tpu7x:2x2x1
jax: 0.10.0
libtpu: 0.0.40
codegen_flags: <defaults>
</compile_context>

<pallas_src>
import functools

import jax
import jax.numpy as jnp
from jax.experimental import pallas as pl
from jax.experimental.pallas import tpu as pltpu

HIDDEN = 32
K = 24              # k of DynamicEdgeConv
BIG = 1e30
NEG = -1e30


def _elu(x):
    # ELU(alpha=1); clamp inside exp so the unselected branch never produces inf.
    return jnp.where(x > 0, x, jnp.exp(jnp.minimum(x, 0.0)) - 1.0)


def _pick_tile(n, target):
    """Largest multiple of 8 <= target that divides n (else n itself: single block)."""
    if n <= target:
        return n
    t = (target // 8) * 8
    while t >= 8:
        if n % t == 0:
            return t
        t -= 8
    return n


def _pick_tm(n, target=128):
    """Query tile: multiple of 128 dividing n (queries live on the lane axis of the
    distance matrix).  target=128 keeps >= 2 grid steps for n >= 256 (v7x has 2 TCs)."""
    if n <= target:
        return n
    t = (target // 128) * 128
    while t >= 128:
        if n % t == 0:
            return t
        t -= 128
    return n


def _vmem_limit_bytes(n, tm, d):
    # (n, tm) distance scratch + double-buffered full candidate arrays + small blocks + slack.
    est = 4 * (n * tm + 4 * n * (2 * d + 2) + 16 * tm * d) + (2 << 20)
    if est <= 32 * 1024 * 1024:
        return None                        # default scoped VMEM is plenty
    # TODO(synk): for very large N this cap (48 MiB, headroom under v7x's 64 MiB/TC) may be
    # insufficient; candidate chunking of the scratch would be needed instead.
    return min(est, 48 * 1024 * 1024)


def _compiler_params(n, tm, d):
    kw = dict(dimension_semantics=("parallel",))
    vl = _vmem_limit_bytes(n, tm, d)
    if vl is not None:
        kw["vmem_limit_bytes"] = vl
    return pltpu.CompilerParams(**kw)


# --------------------------- lc_encode kernel --------------------------------
def _encode_kernel(x_ref, w1_ref, b1_ref, w2_ref, b2_ref, wb1_ref,
                   enc_ref, bp_ref, nrm_ref):
    h = jnp.dot(x_ref[...], w1_ref[...], preferred_element_type=jnp.float32) + b1_ref[...]
    h = _elu(h)
    h = jnp.dot(h, w2_ref[...], preferred_element_type=jnp.float32) + b2_ref[...]
    enc = _elu(h)
    enc_ref[...] = enc
    # Fused epilogue: conv1's per-point precompute while the tile is still in VMEM.
    bp_ref[...] = jnp.dot(enc, wb1_ref[...], preferred_element_type=jnp.float32)
    nrm_ref[...] = jnp.sum(enc * enc, axis=1, keepdims=True)


def lc_encode(x, w1, b1, w2, b2, wb_next, *, tm=None):
    n, fin = x.shape
    d = w1.shape[1]
    if tm is None:
        tm = _pick_tile(n, 128)
    return pl.pallas_call(
        _encode_kernel,
        out_shape=(jax.ShapeDtypeStruct((n, d), jnp.float32),
                   jax.ShapeDtypeStruct((n, d), jnp.float32),
                   jax.ShapeDtypeStruct((n, 1), jnp.float32)),
        grid=(n // tm,),
        in_specs=[
            pl.BlockSpec((tm, fin), lambda i: (i, 0)),
            pl.BlockSpec((fin, d), lambda i: (0, 0)),
            pl.BlockSpec((1, d), lambda i: (0, 0)),
            pl.BlockSpec((d, d), lambda i: (0, 0)),
            pl.BlockSpec((1, d), lambda i: (0, 0)),
            pl.BlockSpec((d, d), lambda i: (0, 0)),
        ],
        out_specs=(pl.BlockSpec((tm, d), lambda i: (i, 0)),
                   pl.BlockSpec((tm, d), lambda i: (i, 0)),
                   pl.BlockSpec((tm, 1), lambda i: (i, 0))),
        compiler_params=pltpu.CompilerParams(dimension_semantics=("parallel",)),
    )(x, w1, b1, w2, b2, wb_next)


# ------------------------- DynamicEdgeConv kernel -----------------------------
# For each target node i:  out_i = max_{j in kNN(i, same graph)} ELU([x_i, x_j - x_i] @ W + b)
# Split W = [Wa; Wb] => message_ij = ELU(a_i + b_j), a_i = x_i @ (Wa - Wb) + b, b_j = x_j @ Wb.
# ELU is monotone, so max_j ELU(a_i + b_j) == ELU(a_i + max_j b_j).
def _edgeconv_features(xq_ref, bq_ref, qn_ref, xa_ref, ba_ref, an_ref,
                       bp_ref, aw_ref, bias_ref, dist_sc, *, k, tc):
    xq = xq_ref[...]                          # (TM, D)   query block
    bq = bq_ref[...]                          # (1, TM)   query batch ids
    qn = qn_ref[...]                          # (1, TM)   query squared norms
    xa = xa_ref[...]                          # (N, D)    all candidate points
    ba = ba_ref[...]                          # (N, 1)    candidate batch ids
    an = an_ref[...]                          # (N, 1)    candidate squared norms

    tm, d = xq.shape
    n = xa.shape[0]

    # Pairwise squared distances with candidates on sublanes, queries on lanes: (N, TM).
    dots = jax.lax.dot_general(xa, xq, (((1,), (1,)), ((), ())),
                               preferred_element_type=jnp.float32)     # (N, TM)
    dist = an + qn - 2.0 * dots
    dist = jnp.where(ba == bq, dist, jnp.float32(BIG))                 # mask cross-graph pairs
    dist_sc[...] = dist

    # k-th smallest same-graph distance per query column.  Only the (1, TM) running
    # threshold is carried; dist stays read-only in scratch (no k full-matrix rewrites).
    # TODO(synk): exact torch_cluster tie-breaking not reproduced; ties at the k-th
    #             distance are aggregated inclusively (measure-zero for random inputs).
    def sel_body(_, thr):
        dcur = dist_sc[...]
        return jnp.min(jnp.where(dcur > thr, dcur, jnp.float32(BIG)),
                       axis=0, keepdims=True)

    thresh = jax.lax.fori_loop(0, k, sel_body,
                               jnp.full((1, tm), jnp.float32(NEG)), unroll=4)

    # Query-side part of the edge message.
    a_part = (jnp.dot(xq, aw_ref[...], preferred_element_type=jnp.float32)
              + bias_ref[...])                                         # (TM, D)

    # Masked max over candidates of b_part, as lane-dense 2-D ops.  The 0/-1e30 penalty is
    # built once per candidate chunk; each feature column is a (TC, TM) broadcast-add +
    # axis-0 max.  Results are accumulated transposed as (D, TM) and transposed once.
    n_chunks = n // tc
    row_iota = jax.lax.broadcasted_iota(jnp.int32, (8, tm), 0)

    def chunk_body(c, acc_t):                                          # acc_t: (D, TM)
        start = pl.multiple_of(c * tc, tc)
        dc = dist_sc[pl.ds(start, tc), :]                              # (TC, TM)
        pen = jnp.where((dc <= thresh) & (dc < jnp.float32(BIG)),
                        jnp.float32(0.0), jnp.float32(NEG))            # (TC, TM), once/chunk
        bc = bp_ref[pl.ds(start, tc), :]                               # (TC, D)
        groups = []
        for g0 in range(0, d, 8):                                      # 8 feature cols/group
            grp = jnp.full((8, tm), jnp.float32(NEG), jnp.float32)
            for c8 in range(8):
                f = g0 + c8
                colmax = jnp.max(pen + bc[:, f:f + 1], axis=0, keepdims=True)   # (1, TM)
                grp = jnp.where(row_iota == c8, colmax, grp)
            groups.append(grp)                                         # (8, TM)
        return jnp.maximum(acc_t, jnp.concatenate(groups, axis=0))     # (D, TM)

    acc0 = jnp.full((d, tm), jnp.float32(NEG), jnp.float32)
    maxb_t = jax.lax.fori_loop(0, n_chunks, chunk_body, acc0)

    return _elu(a_part + maxb_t.T)                                     # (TM, D)


def _edgeconv_kernel(xq_ref, bq_ref, qn_ref, xa_ref, ba_ref, an_ref,
                     bp_ref, aw_ref, bias_ref, wbn_ref,
                     o_ref, bnext_ref, nrm_ref, dist_sc, *, k, tc):
    feat = _edgeconv_features(xq_ref, bq_ref, qn_ref, xa_ref, ba_ref, an_ref,
                              bp_ref, aw_ref, bias_ref, dist_sc, k=k, tc=tc)
    o_ref[...] = feat
    # Fused epilogue: next layer's per-point precompute while the tile is still in VMEM.
    bnext_ref[...] = jnp.dot(feat, wbn_ref[...], preferred_element_type=jnp.float32)
    nrm_ref[...] = jnp.sum(feat * feat, axis=1, keepdims=True)


def _edgeconv_output_kernel(xq_ref, bq_ref, qn_ref, xa_ref, ba_ref, an_ref,
                            bp_ref, aw_ref, bias_ref,
                            w1_ref, b1_ref, w2_ref, b2_ref, w3_ref, b3_ref,
                            o_ref, dist_sc, *, k, tc):
    feat = _edgeconv_features(xq_ref, bq_ref, qn_ref, xa_ref, ba_ref, an_ref,
                              bp_ref, aw_ref, bias_ref, dist_sc, k=k, tc=tc)
    h = _elu(jnp.dot(feat, w1_ref[...], preferred_element_type=jnp.float32) + b1_ref[...])
    h = _elu(jnp.dot(h, w2_ref[...], preferred_element_type=jnp.float32) + b2_ref[...])
    o_ref[...] = jnp.dot(h, w3_ref[...], preferred_element_type=jnp.float32) + b3_ref[...]


def dynamic_edge_conv(x, b_part, norms_col, batch_col, batch_row, aw, bias,
                      *, wb_next=None, out_mlp=None, k=K, tm=None, tc=None):
    n, d = x.shape
    if tm is None:
        tm = _pick_tm(n, 128)
    if tc is None:
        tc = _pick_tile(n, 128)
    assert n % tm == 0 and n % tc == 0

    norms_row = norms_col.reshape(1, n)

    in_specs = [
        pl.BlockSpec((tm, d), lambda i: (i, 0)),   # query features
        pl.BlockSpec((1, tm), lambda i: (0, i)),   # query batch ids (row)
        pl.BlockSpec((1, tm), lambda i: (0, i)),   # query squared norms (row)
        pl.BlockSpec((n, d), lambda i: (0, 0)),    # all candidate features
        pl.BlockSpec((n, 1), lambda i: (0, 0)),    # candidate batch ids
        pl.BlockSpec((n, 1), lambda i: (0, 0)),    # candidate squared norms
        pl.BlockSpec((n, d), lambda i: (0, 0)),    # b_part = x @ Wb
        pl.BlockSpec((d, d), lambda i: (0, 0)),    # Wa - Wb
        pl.BlockSpec((1, d), lambda i: (0, 0)),    # bias
    ]
    args = [x, batch_row, norms_row, x, batch_col, norms_col, b_part, aw, bias]

    if out_mlp is None:
        assert wb_next is not None
        kern = functools.partial(_edgeconv_kernel, k=k, tc=tc)
        in_specs.append(pl.BlockSpec((d, d), lambda i: (0, 0)))        # next layer's Wb
        args.append(wb_next)
        out_shape = (jax.ShapeDtypeStruct((n, d), jnp.float32),
                     jax.ShapeDtypeStruct((n, d), jnp.float32),
                     jax.ShapeDtypeStruct((n, 1), jnp.float32))
        out_specs = (pl.BlockSpec((tm, d), lambda i: (i, 0)),
                     pl.BlockSpec((tm, d), lambda i: (i, 0)),
                     pl.BlockSpec((tm, 1), lambda i: (i, 0)))
    else:
        (w1, b1), (w2, b2), (w3, b3) = out_mlp
        kern = functools.partial(_edgeconv_output_kernel, k=k, tc=tc)
        in_specs += [
            pl.BlockSpec(w1.shape, lambda i: (0, 0)),
            pl.BlockSpec((1, w1.shape[1]), lambda i: (0, 0)),
            pl.BlockSpec(w2.shape, lambda i: (0, 0)),
            pl.BlockSpec((1, w2.shape[1]), lambda i: (0, 0)),
            pl.BlockSpec(w3.shape, lambda i: (0, 0)),
            pl.BlockSpec((1, w3.shape[1]), lambda i: (0, 0)),
        ]
        args += [w1, b1.reshape(1, -1), w2, b2.reshape(1, -1), w3, b3.reshape(1, -1)]
        out_dim = w3.shape[1]
        out_shape = jax.ShapeDtypeStruct((n, out_dim), jnp.float32)
        out_specs = pl.BlockSpec((tm, out_dim), lambda i: (i, 0))

    return pl.pallas_call(
        kern,
        out_shape=out_shape,
        grid=(n // tm,),
        in_specs=in_specs,
        out_specs=out_specs,
        scratch_shapes=[pltpu.VMEM((n, tm), jnp.float32)],   # masked distance matrix
        compiler_params=_compiler_params(n, tm, d),
    )(*args)


# ------------------------------ parameters ------------------------------------
def _linear_init(key, fin, fout):
    kw, kb = jax.random.split(key)
    bound = 1.0 / (fin ** 0.5)
    w = jax.random.uniform(kw, (fin, fout), jnp.float32, -bound, bound)
    b = jax.random.uniform(kb, (fout,), jnp.float32, -bound, bound)
    return w, b


def init_params(key):
    ks = jax.random.split(key, 8)
    return dict(
        enc=(_linear_init(ks[0], 4, HIDDEN), _linear_init(ks[1], HIDDEN, HIDDEN)),
        conv1=_linear_init(ks[2], 2 * HIDDEN, HIDDEN),
        conv2=_linear_init(ks[3], 2 * HIDDEN, HIDDEN),
        conv3=_linear_init(ks[4], 2 * HIDDEN, HIDDEN),
        out=(_linear_init(ks[5], 32, 32), _linear_init(ks[6], 32, 16),
             _linear_init(ks[7], 16, 8)),
    )


def _edge_params(wb_pair, d=HIDDEN):
    w, b = wb_pair
    wa, wb = w[:d, :], w[d:, :]
    return wa - wb, b.reshape(1, d), wb


# ------------------------------ full network ----------------------------------
def net_forward(params, x_lc, batch_lc):
    n = x_lc.shape[0]
    batch_col = batch_lc.reshape(n, 1).astype(jnp.int32)
    batch_row = batch_col.reshape(1, n)

    (w1, b1), (w2, b2) = params["enc"]
    aw1, bias1, wb1 = _edge_params(params["conv1"])
    aw2, bias2, wb2 = _edge_params(params["conv2"])
    aw3, bias3, wb3 = _edge_params(params["conv3"])

    # Each kernel also emits the next layer's b_part / squared norms (epilogue fusion).
    enc, bp, nrm = lc_encode(x_lc, w1, b1.reshape(1, -1), w2, b2.reshape(1, -1), wb1)
    f, bp, nrm = dynamic_edge_conv(enc, bp, nrm, batch_col, batch_row, aw1, bias1, wb_next=wb2)
    f, bp, nrm = dynamic_edge_conv(f, bp, nrm, batch_col, batch_row, aw2, bias2, wb_next=wb3)
    # Output MLP fused into the epilogue of the last DynamicEdgeConv.
    out = dynamic_edge_conv(f, bp, nrm, batch_col, batch_row, aw3, bias3,
                            out_mlp=params["out"])
    return out, batch_lc


# ------------------------------ pure-JAX reference -----------------------------
def _edgeconv_ref(x, batch, w, b, k):
    qn = jnp.sum(x * x, axis=-1, keepdims=True)
    dist = qn + qn.T - 2.0 * x @ x.T
    same = batch == batch.T
    dist = jnp.where(same, dist, BIG)
    _, idx = jax.lax.top_k(-dist, k)                         # (N, k) nearest (incl. self)
    xi = x[:, None, :]
    xj = x[idx]                                              # (N, k, D)
    feat = jnp.concatenate([jnp.broadcast_to(xi, xj.shape), xj - xi], axis=-1)
    msg = _elu(feat @ w + b)
    return jnp.max(msg, axis=1)


def net_forward_ref(params, x_lc, batch_lc):
    (w1, b1), (w2, b2) = params["enc"]
    f = _elu(_elu(x_lc @ w1 + b1) @ w2 + b2)
    for name in ("conv1", "conv2", "conv3"):
        w, b = params[name]
        f = _edgeconv_ref(f, batch_lc, w, b, K)
    (ow1, ob1), (ow2, ob2), (ow3, ob3) = params["out"]
    out = _elu(f @ ow1 + ob1)
    out = _elu(out @ ow2 + ob2)
    return out @ ow3 + ob3, batch_lc


if __name__ == "__main__":
    key = jax.random.PRNGKey(0)
    kx, kp = jax.random.split(key)

    n_per_graph, n_graphs = 64, 4
    n = n_per_graph * n_graphs
    x_lc = jax.random.normal(kx, (n, 4), jnp.float32)
    batch_lc = jnp.repeat(jnp.arange(n_graphs, dtype=jnp.int32),
                          n_per_graph).reshape(n, 1)

    params = init_params(kp)

    out, batch = net_forward(params, x_lc, batch_lc)
    out = jax.block_until_ready(out)
    assert out.shape == (n, 8) and batch.shape == (n, 1)

    ref_out, _ = net_forward_ref(params, x_lc, batch_lc)
    max_err = float(jnp.max(jnp.abs(out - ref_out)))
    assert max_err < 1e-3, f"mismatch vs reference: {max_err}"

    print("KERNEL_OK")
</pallas_src>

<mosaic_0001>
module attributes {stable_mosaic.version = 11 : i64} {
  func.func @_encode_kernel(%arg0: i32, %arg1: memref<128x4xf32, #tpu.memory_space<vmem>>, %arg2: memref<4x32xf32, #tpu.memory_space<vmem>>, %arg3: memref<1x32xf32, #tpu.memory_space<vmem>>, %arg4: memref<32x32xf32, #tpu.memory_space<vmem>>, %arg5: memref<1x32xf32, #tpu.memory_space<vmem>>, %arg6: memref<32x32xf32, #tpu.memory_space<vmem>>, %arg7: memref<128x32xf32, #tpu.memory_space<vmem>>, %arg8: memref<128x32xf32, #tpu.memory_space<vmem>>, %arg9: memref<128x1xf32, #tpu.memory_space<vmem>>) attributes {dimension_semantics = [#tpu.dimension_semantics<parallel>], iteration_bounds = array<i64: 2>, scalar_prefetch = 0 : i64, scratch_operands = 0 : i64, tpu.core_type = #tpu.core_type<tc>, window_params = [{transform_indices = @transform_0, window_bounds = array<i64: 128, 4>}, {pipeline_mode = #tpu.pipeline_mode<synchronous>, transform_indices = @transform_1, window_bounds = array<i64: 4, 32>}, {pipeline_mode = #tpu.pipeline_mode<synchronous>, transform_indices = @transform_2, window_bounds = array<i64: 1, 32>}, {pipeline_mode = #tpu.pipeline_mode<synchronous>, transform_indices = @transform_3, window_bounds = array<i64: 32, 32>}, {pipeline_mode = #tpu.pipeline_mode<synchronous>, transform_indices = @transform_4, window_bounds = array<i64: 1, 32>}, {pipeline_mode = #tpu.pipeline_mode<synchronous>, transform_indices = @transform_5, window_bounds = array<i64: 32, 32>}, {transform_indices = @transform_6, window_bounds = array<i64: 128, 32>}, {transform_indices = @transform_7, window_bounds = array<i64: 128, 32>}, {transform_indices = @transform_8, window_bounds = array<i64: 128, 1>}]} {
    %c0 = arith.constant 0 : index
    %c0_0 = arith.constant 0 : index
    %0 = vector.load %arg1[%c0, %c0_0] : memref<128x4xf32, #tpu.memory_space<vmem>>, vector<128x4xf32>
    %c0_1 = arith.constant 0 : index
    %c0_2 = arith.constant 0 : index
    %1 = vector.load %arg2[%c0_1, %c0_2] : memref<4x32xf32, #tpu.memory_space<vmem>>, vector<4x32xf32>
    %cst = arith.constant dense<0.000000e+00> : vector<128x32xf32>
    %2 = tpu.matmul %0, %1, %cst {dimension_numbers = #tpu.dot_dimension_numbers<[1], [0], [0], [1], [0, 0, 1, 1], [], []>} : vector<128x4xf32>, vector<4x32xf32>, vector<128x32xf32> -> vector<128x32xf32>
    %c0_3 = arith.constant 0 : index
    %c0_4 = arith.constant 0 : index
    %3 = vector.load %arg3[%c0_3, %c0_4] : memref<1x32xf32, #tpu.memory_space<vmem>>, vector<1x32xf32>
    %4 = vector.broadcast %3 : vector<1x32xf32> to vector<128x32xf32>
    %5 = arith.addf %2, %4 : vector<128x32xf32>
    %cst_5 = arith.constant 0.000000e+00 : f32
    %6 = vector.broadcast %cst_5 : f32 to vector<128x32xf32>
    %7 = arith.cmpf ogt, %5, %6 : vector<128x32xf32>
    %cst_6 = arith.constant 0.000000e+00 : f32
    %8 = vector.broadcast %cst_6 : f32 to vector<128x32xf32>
    %9 = arith.minimumf %5, %8 : vector<128x32xf32>
    %10 = math.exp %9 : vector<128x32xf32>
    %cst_7 = arith.constant 1.000000e+00 : f32
    %11 = vector.broadcast %cst_7 : f32 to vector<128x32xf32>
    %12 = arith.subf %10, %11 : vector<128x32xf32>
    %13 = arith.select %7, %5, %12 : vector<128x32xi1>, vector<128x32xf32>
    %c0_8 = arith.constant 0 : index
    %c0_9 = arith.constant 0 : index
    %14 = vector.load %arg4[%c0_8, %c0_9] : memref<32x32xf32, #tpu.memory_space<vmem>>, vector<32x32xf32>
    %cst_10 = arith.constant dense<0.000000e+00> : vector<128x32xf32>
    %15 = tpu.matmul %13, %14, %cst_10 {dimension_numbers = #tpu.dot_dimension_numbers<[1], [0], [0], [1], [0, 0, 1, 1], [], []>} : vector<128x32xf32>, vector<32x32xf32>, vector<128x32xf32> -> vector<128x32xf32>
    %c0_11 = arith.constant 0 : index
    %c0_12 = arith.constant 0 : index
    %16 = vector.load %arg5[%c0_11, %c0_12] : memref<1x32xf32, #tpu.memory_space<vmem>>, vector<1x32xf32>
    %17 = vector.broadcast %16 : vector<1x32xf32> to vector<128x32xf32>
    %18 = arith.addf %15, %17 : vector<128x32xf32>
    %cst_13 = arith.constant 0.000000e+00 : f32
    %19 = vector.broadcast %cst_13 : f32 to vector<128x32xf32>
    %20 = arith.cmpf ogt, %18, %19 : vector<128x32xf32>
    %cst_14 = arith.constant 0.000000e+00 : f32
    %21 = vector.broadcast %cst_14 : f32 to vector<128x32xf32>
    %22 = arith.minimumf %18, %21 : vector<128x32xf32>
    %23 = math.exp %22 : vector<128x32xf32>
    %cst_15 = arith.constant 1.000000e+00 : f32
    %24 = vector.broadcast %cst_15 : f32 to vector<128x32xf32>
    %25 = arith.subf %23, %24 : vector<128x32xf32>
    %26 = arith.select %20, %18, %25 : vector<128x32xi1>, vector<128x32xf32>
    %c0_16 = arith.constant 0 : index
    %c0_17 = arith.constant 0 : index
    %27 = vector.load %arg7[%c0_16, %c0_17] : memref<128x32xf32, #tpu.memory_space<vmem>>, vector<128x32xf32>
    tpu.vector_store %arg7[%c0_16, %c0_17], %26 {strides = array<i32>} : memref<128x32xf32, #tpu.memory_space<vmem>>, vector<128x32xf32>,
    %c0_18 = arith.constant 0 : index
    %c0_19 = arith.constant 0 : index
    %28 = vector.load %arg6[%c0_18, %c0_19] : memref<32x32xf32, #tpu.memory_space<vmem>>, vector<32x32xf32>
    %cst_20 = arith.constant dense<0.000000e+00> : vector<128x32xf32>
    %29 = tpu.matmul %26, %28, %cst_20 {dimension_numbers = #tpu.dot_dimension_numbers<[1], [0], [0], [1], [0, 0, 1, 1], [], []>} : vector<128x32xf32>, vector<32x32xf32>, vector<128x32xf32> -> vector<128x32xf32>
    %c0_21 = arith.constant 0 : index
    %c0_22 = arith.constant 0 : index
    %30 = vector.load %arg8[%c0_21, %c0_22] : memref<128x32xf32, #tpu.memory_space<vmem>>, vector<128x32xf32>
    tpu.vector_store %arg8[%c0_21, %c0_22], %29 {strides = array<i32>} : memref<128x32xf32, #tpu.memory_space<vmem>>, vector<128x32xf32>,
    %31 = arith.mulf %26, %26 : vector<128x32xf32>
    %cst_23 = arith.constant dense<0.000000e+00> : vector<128xf32>
    %32 = vector.multi_reduction <add>, %31, %cst_23 [1] : vector<128x32xf32> to vector<128xf32>
    %33 = vector.shape_cast %32 : vector<128xf32> to vector<128x1xf32>
    %c0_24 = arith.constant 0 : index
    %c0_25 = arith.constant 0 : index
    %34 = vector.load %arg9[%c0_24, %c0_25] : memref<128x1xf32, #tpu.memory_space<vmem>>, vector<128x1xf32>
    tpu.vector_store %arg9[%c0_24, %c0_25], %33 {strides = array<i32>} : memref<128x1xf32, #tpu.memory_space<vmem>>, vector<128x1xf32>,
    return
  }
  func.func @transform_0(%arg0: i32) -> (i32, i32) {
    %c0_i32 = arith.constant 0 : i32
    %c0_i32_0 = arith.constant 0 : i32
    return %arg0, %c0_i32 : i32, i32
  }
  func.func @transform_1(%arg0: i32) -> (i32, i32) {
    %c0_i32 = arith.constant 0 : i32
    %c0_i32_0 = arith.constant 0 : i32
    %c0_i32_1 = arith.constant 0 : i32
    return %c0_i32, %c0_i32_0 : i32, i32
  }
  func.func @transform_2(%arg0: i32) -> (i32, i32) {
    %c0_i32 = arith.constant 0 : i32
    %c0_i32_0 = arith.constant 0 : i32
    %c0_i32_1 = arith.constant 0 : i32
    return %c0_i32, %c0_i32_0 : i32, i32
  }
  func.func @transform_3(%arg0: i32) -> (i32, i32) {
    %c0_i32 = arith.constant 0 : i32
    %c0_i32_0 = arith.constant 0 : i32
    %c0_i32_1 = arith.constant 0 : i32
    return %c0_i32, %c0_i32_0 : i32, i32
  }
  func.func @transform_4(%arg0: i32) -> (i32, i32) {
    %c0_i32 = arith.constant 0 : i32
    %c0_i32_0 = arith.constant 0 : i32
    %c0_i32_1 = arith.constant 0 : i32
    return %c0_i32, %c0_i32_0 : i32, i32
  }
  func.func @transform_5(%arg0: i32) -> (i32, i32) {
    %c0_i32 = arith.constant 0 : i32
    %c0_i32_0 = arith.constant 0 : i32
    %c0_i32_1 = arith.constant 0 : i32
    return %c0_i32, %c0_i32_0 : i32, i32
  }
  func.func @transform_6(%arg0: i32) -> (i32, i32) {
    %c0_i32 = arith.constant 0 : i32
    %c0_i32_0 = arith.constant 0 : i32
    return %arg0, %c0_i32 : i32, i32
  }
  func.func @transform_7(%arg0: i32) -> (i32, i32) {
    %c0_i32 = arith.constant 0 : i32
    %c0_i32_0 = arith.constant 0 : i32
    return %arg0, %c0_i32 : i32, i32
  }
  func.func @transform_8(%arg0: i32) -> (i32, i32) {
    %c0_i32 = arith.constant 0 : i32
    %c0_i32_0 = arith.constant 0 : i32
    return %arg0, %c0_i32 : i32, i32
  }
}

</mosaic_0001>

<llo_original>
// kernel: tpu_custom_call.1
$region0: #{tpu_custom_call.1}
  #allocation0 [shape = 'u32[]', space=smem, size = 0x4, offset = 0x4, fixed_abs, tag = 'smem constant byte address 0x4 - core index']
  #allocation1 [shape = 'u32[144,128]{1,0:T(1,128)}', space=vmem, size = 0x12000, scoped, tag = 'internal scratch']
  %s0 = inlined_call_operand.vmem [shape: f32[256,4], index: 0, kind: input, shape index: {}]
  %s1 = inlined_call_operand.vmem [shape: f32[4,32], index: 1, kind: input, shape index: {}]
  %s2 = inlined_call_operand.vmem [shape: f32[1,32], index: 2, kind: input, shape index: {}]
  %s3 = inlined_call_operand.vmem [shape: f32[32,32], index: 3, kind: input, shape index: {}]
  %s4 = inlined_call_operand.vmem [shape: f32[1,32], index: 4, kind: input, shape index: {}]
  %s5 = inlined_call_operand.vmem [shape: f32[32,32], index: 5, kind: input, shape index: {}]
  %s6 = inlined_call_operand.vmem [shape: f32[256,32], index: 6, kind: output, shape index: {0}]
  %s7 = inlined_call_operand.vmem [shape: f32[256,32], index: 7, kind: output, shape index: {1}]
  %s8 = inlined_call_operand.vmem [shape: f32[256,1], index: 8, kind: output, shape index: {2}]
  %9 = xla_tuple %s6, %s7, %s8
  %s10 = sld [smem:[#allocation0]]
  $region73: #{tpu_custom_call.1} parent=0
    _
  %s12 = ssub.s32 1, %s10
  %s13 = scalar_select 0, %s12, %s10
  loop: start=0, step=1, limit=4
  $region2: #{tpu_custom_call.1} parent=0 // loop_pre_header
    _
  $region3: #{tpu_custom_call.1} parent=0 // loop_header
    %s15 = sphi 0, %s19
    %p16 = scmp.ge.s32.totalorder %s15, 4
    %s25 = sphi 0, %s27
    %s28 = sphi 0, %s25
    %s29 = sphi 0, %s28
    %s45 = sphi 0, %s29
    %s49 = sphi 0, %s49
    %s51 = sphi 0, %s49
    %s52 = sphi 0, %s51
    %s66 = sphi 0, %s52
    %s70 = sphi 0, %s70
    %s72 = sphi 0, %s70
    %s73 = sphi 0, %s72
    %s87 = sphi 0, %s73
    %s91 = sphi 0, %s91
    %s93 = sphi 0, %s91
    %s94 = sphi 0, %s93
    %s108 = sphi 0, %s94
    %s112 = sphi 0, %s112
    %s114 = sphi 0, %s112
    %s115 = sphi 0, %s114
    %s129 = sphi 0, %s115
    %s133 = sphi 0, %s133
    %s135 = sphi 0, %s133
    %s136 = sphi 0, %s135
    %s150 = sphi 0, %s136
    %s156 = sphi 0, %s158
    %s159 = sphi 0, %s156
    %s160 = sphi 0, %s159
    %s176 = sphi 0, %s160
    %s182 = sphi 0, %s184
    %s185 = sphi 0, %s182
    %s186 = sphi 0, %s185
    %s202 = sphi 0, %s186
    %s208 = sphi 0, %s210
    %s211 = sphi 0, %s208
    %s212 = sphi 0, %s211
    %s228 = sphi 0, %s212
  $region4: #{tpu_custom_call.1} parent=0 // loop_header_branch
    %18 = sbr.rel (%p16) target = $region8
  $region5: #{tpu_custom_call.1} parent=0 // loop_body
    %s20 = ssub.s32 %s15, 1
    %s21 = ssub.s32 %s15, 2
    %s22 = sadd.s32 %s15, 1
    %s23 = ssub.s32 %s15, %s22
    %p24 = scmp.eq.s32.totalorder %s23, 0
    %s26 = sadd.s32 %s25, 1
    %s27 = scalar_select %p24, %s25, %s26
    %p30 = pneg %p24
    %p31 = scmp.eq.s32.totalorder %s15, 1
    %p32 = por %p30, %p31
    %p33 = scmp.ne.s32.totalorder %s25, %s28
    %p34 = scmp.eq.s32.totalorder %s15, 0
    %p35 = por %p33, %p34
    %p36 = scmp.ne.s32.totalorder %s25, %s28
    %p37 = scmp.eq.s32.totalorder %s20, 1
    %p38 = por %p36, %p37
    %p39 = scmp.ne.s32.totalorder %s28, %s29
    %p40 = scmp.eq.s32.totalorder %s20, 0
    %p41 = por %p39, %p40
    %p42 = scmp.ne.s32.totalorder %s28, %s29
    %p43 = scmp.eq.s32.totalorder %s21, 1
    %p44 = por %p42, %p43
    %p46 = scmp.ne.s32.totalorder %s29, %s45
    %p47 = scmp.eq.s32.totalorder %s21, 0
    %p48 = por %p46, %p47
    %s50 = sadd.s32 %s49, 1
    %p53 = scmp.eq.s32.totalorder %s15, 1
    %p54 = scmp.ne.s32.totalorder %s49, %s51
    %p55 = scmp.eq.s32.totalorder %s15, 0
    %p56 = por %p54, %p55
    %p57 = scmp.ne.s32.totalorder %s49, %s51
    %p58 = scmp.eq.s32.totalorder %s20, 1
    %p59 = por %p57, %p58
    %p60 = scmp.ne.s32.totalorder %s51, %s52
    %p61 = scmp.eq.s32.totalorder %s20, 0
    %p62 = por %p60, %p61
    %p63 = scmp.ne.s32.totalorder %s51, %s52
    %p64 = scmp.eq.s32.totalorder %s21, 1
    %p65 = por %p63, %p64
    %p67 = scmp.ne.s32.totalorder %s52, %s66
    %p68 = scmp.eq.s32.totalorder %s21, 0
    %p69 = por %p67, %p68
    %s71 = sadd.s32 %s70, 1
    %p74 = scmp.eq.s32.totalorder %s15, 1
    %p75 = scmp.ne.s32.totalorder %s70, %s72
    %p76 = scmp.eq.s32.totalorder %s15, 0
    %p77 = por %p75, %p76
    %p78 = scmp.ne.s32.totalorder %s70, %s72
    %p79 = scmp.eq.s32.totalorder %s20, 1
    %p80 = por %p78, %p79
    %p81 = scmp.ne.s32.totalorder %s72, %s73
    %p82 = scmp.eq.s32.totalorder %s20, 0
    %p83 = por %p81, %p82
    %p84 = scmp.ne.s32.totalorder %s72, %s73
    %p85 = scmp.eq.s32.totalorder %s21, 1
    %p86 = por %p84, %p85
    %p88 = scmp.ne.s32.totalorder %s73, %s87
    %p89 = scmp.eq.s32.totalorder %s21, 0
    %p90 = por %p88, %p89
    %s92 = sadd.s32 %s91, 1
    %p95 = scmp.eq.s32.totalorder %s15, 1
    %p96 = scmp.ne.s32.totalorder %s91, %s93
    %p97 = scmp.eq.s32.totalorder %s15, 0
    %p98 = por %p96, %p97
    %p99 = scmp.ne.s32.totalorder %s91, %s93
    %p100 = scmp.eq.s32.totalorder %s20, 1
    %p101 = por %p99, %p100
    %p102 = scmp.ne.s32.totalorder %s93, %s94
    %p103 = scmp.eq.s32.totalorder %s20, 0
    %p104 = por %p102, %p103
    %p105 = scmp.ne.s32.totalorder %s93, %s94
    %p106 = scmp.eq.s32.totalorder %s21, 1
    %p107 = por %p105, %p106
    %p109 = scmp.ne.s32.totalorder %s94, %s108
    %p110 = scmp.eq.s32.totalorder %s21, 0
    %p111 = por %p109, %p110
    %s113 = sadd.s32 %s112, 1
    %p116 = scmp.eq.s32.totalorder %s15, 1
    %p117 = scmp.ne.s32.totalorder %s112, %s114
    %p118 = scmp.eq.s32.totalorder %s15, 0
    %p119 = por %p117, %p118
    %p120 = scmp.ne.s32.totalorder %s112, %s114
    %p121 = scmp.eq.s32.totalorder %s20, 1
    %p122 = por %p120, %p121
    %p123 = scmp.ne.s32.totalorder %s114, %s115
    %p124 = scmp.eq.s32.totalorder %s20, 0
    %p125 = por %p123, %p124
    %p126 = scmp.ne.s32.totalorder %s114, %s115
    %p127 = scmp.eq.s32.totalorder %s21, 1
    %p128 = por %p126, %p127
    %p130 = scmp.ne.s32.totalorder %s115, %s129
    %p131 = scmp.eq.s32.totalorder %s21, 0
    %p132 = por %p130, %p131
    %s134 = sadd.s32 %s133, 1
    %p137 = scmp.eq.s32.totalorder %s15, 1
    %p138 = scmp.ne.s32.totalorder %s133, %s135
    %p139 = scmp.eq.s32.totalorder %s15, 0
    %p140 = por %p138, %p139
    %p141 = scmp.ne.s32.totalorder %s133, %s135
    %p142 = scmp.eq.s32.totalorder %s20, 1
    %p143 = por %p141, %p142
    %p144 = scmp.ne.s32.totalorder %s135, %s136
    %p145 = scmp.eq.s32.totalorder %s20, 0
    %p146 = por %p144, %p145
    %p147 = scmp.ne.s32.totalorder %s135, %s136
    %p148 = scmp.eq.s32.totalorder %s21, 1
    %p149 = por %p147, %p148
    %p151 = scmp.ne.s32.totalorder %s136, %s150
    %p152 = scmp.eq.s32.totalorder %s21, 0
    %p153 = por %p151, %p152
    %s154 = ssub.s32 %s15, %s22
    %p155 = scmp.eq.s32.totalorder %s154, 0
    %s157 = sadd.s32 %s156, 1
    %s158 = scalar_select %p155, %s156, %s157
    %p161 = pneg %p155
    %p162 = scmp.eq.s32.totalorder %s15, 1
    %p163 = por %p161, %p162
    %p164 = scmp.ne.s32.totalorder %s156, %s159
    %p165 = scmp.eq.s32.totalorder %s15, 0
    %p166 = por %p164, %p165
    %p167 = scmp.ne.s32.totalorder %s156, %s159
    %p168 = scmp.eq.s32.totalorder %s20, 1
    %p169 = por %p167, %p168
    %p170 = scmp.ne.s32.totalorder %s159, %s160
    %p171 = scmp.eq.s32.totalorder %s20, 0
    %p172 = por %p170, %p171
    %p173 = scmp.ne.s32.totalorder %s159, %s160
    %p174 = scmp.eq.s32.totalorder %s21, 1
    %p175 = por %p173, %p174
    %p177 = scmp.ne.s32.totalorder %s160, %s176
    %p178 = scmp.eq.s32.totalorder %s21, 0
    %p179 = por %p177, %p178
    %s180 = ssub.s32 %s15, %s22
    %p181 = scmp.eq.s32.totalorder %s180, 0
    %s183 = sadd.s32 %s182, 1
    %s184 = scalar_select %p181, %s182, %s183
    %p187 = pneg %p181
    %p188 = scmp.eq.s32.totalorder %s15, 1
    %p189 = por %p187, %p188
    %p190 = scmp.ne.s32.totalorder %s182, %s185
    %p191 = scmp.eq.s32.totalorder %s15, 0
    %p192 = por %p190, %p191
    %p193 = scmp.ne.s32.totalorder %s182, %s185
    %p194 = scmp.eq.s32.totalorder %s20, 1
    %p195 = por %p193, %p194
    %p196 = scmp.ne.s32.totalorder %s185, %s186
    %p197 = scmp.eq.s32.totalorder %s20, 0
    %p198 = por %p196, %p197
    %p199 = scmp.ne.s32.totalorder %s185, %s186
    %p200 = scmp.eq.s32.totalorder %s21, 1
    %p201 = por %p199, %p200
    %p203 = scmp.ne.s32.totalorder %s186, %s202
    %p204 = scmp.eq.s32.totalorder %s21, 0
    %p205 = por %p203, %p204
    %s206 = ssub.s32 %s15, %s22
    %p207 = scmp.eq.s32.totalorder %s206, 0
    %s209 = sadd.s32 %s208, 1
    %s210 = scalar_select %p207, %s208, %s209
    %p213 = pneg %p207
    %p214 = scmp.eq.s32.totalorder %s15, 1
    %p215 = por %p213, %p214
    %p216 = scmp.ne.s32.totalorder %s208, %s211
    %p217 = scmp.eq.s32.totalorder %s15, 0
    %p218 = por %p216, %p217
    %p219 = scmp.ne.s32.totalorder %s208, %s211
    %p220 = scmp.eq.s32.totalorder %s20, 1
    %p221 = por %p219, %p220
    %p222 = scmp.ne.s32.totalorder %s211, %s212
    %p223 = scmp.eq.s32.totalorder %s20, 0
    %p224 = por %p222, %p223
    %p225 = scmp.ne.s32.totalorder %s211, %s212
    %p226 = scmp.eq.s32.totalorder %s21, 1
    %p227 = por %p225, %p226
    %p229 = scmp.ne.s32.totalorder %s212, %s228
    %p230 = scmp.eq.s32.totalorder %s21, 0
    %p231 = por %p229, %p230
    %p232 = scmp.le.s32.totalorder 1, %s15
    %p233 = scmp.lt.s32.totalorder %s15, 3
    %p234 = pnand %p232, %p233
    %p235 = pneg %p234
    // Predicated region
    $region9: #{tpu_custom_call.1} parent=5 // pred_check
      _
    $region10: #{tpu_custom_call.1} parent=5 // pred_check_branch
      %237 = sbr.rel (%p234) target = $region12
    $region11: #{tpu_custom_call.1} parent=5 // pred_region
      %s238 = ssub.s32 %s15, 1
      // Predicated region
      $region13: #{tpu_custom_call.1} parent=11 // pred_check
        %p239 = pneg %p62
      $region14: #{tpu_custom_call.1} parent=11 // pred_check_branch
        %241 = sbr.rel (%p239) target = $region16
      $region15: #{tpu_custom_call.1} parent=11 // pred_region
        _
      $region16: #{tpu_custom_call.1} parent=11 // pred_fallthru
        _
      // Predicated region
      $region17: #{tpu_custom_call.1} parent=11 // pred_check
        %p242 = pneg %p83
      $region18: #{tpu_custom_call.1} parent=11 // pred_check_branch
        %244 = sbr.rel (%p242) target = $region20
      $region19: #{tpu_custom_call.1} parent=11 // pred_region
        _
      $region20: #{tpu_custom_call.1} parent=11 // pred_fallthru
        _
      // Predicated region
      $region21: #{tpu_custom_call.1} parent=11 // pred_check
        %p245 = pneg %p104
      $region22: #{tpu_custom_call.1} parent=11 // pred_check_branch
        %247 = sbr.rel (%p245) target = $region24
      $region23: #{tpu_custom_call.1} parent=11 // pred_region
        _
      $region24: #{tpu_custom_call.1} parent=11 // pred_fallthru
        _
      // Predicated region
      $region25: #{tpu_custom_call.1} parent=11 // pred_check
        %p248 = pneg %p125
      $region26: #{tpu_custom_call.1} parent=11 // pred_check_branch
        %250 = sbr.rel (%p248) target = $region28
      $region27: #{tpu_custom_call.1} parent=11 // pred_region
        _
      $region28: #{tpu_custom_call.1} parent=11 // pred_fallthru
        _
      // Predicated region
      $region29: #{tpu_custom_call.1} parent=11 // pred_check
        %p251 = pneg %p146
      $region30: #{tpu_custom_call.1} parent=11 // pred_check_branch
        %253 = sbr.rel (%p251) target = $region32
      $region31: #{tpu_custom_call.1} parent=11 // pred_region
        _
      $region32: #{tpu_custom_call.1} parent=11 // pred_fallthru
        _
    $region12: #{tpu_custom_call.1} parent=5 // pred_fallthru
      _
    %p254 = scmp.lt.s32.totalorder %s15, 2
    // Predicated region
    $region33: #{tpu_custom_call.1} parent=5 // pred_check
      %p255 = pneg %p254
    $region34: #{tpu_custom_call.1} parent=5 // pred_check_branch
      %257 = sbr.rel (%p255) target = $region36
    $region35: #{tpu_custom_call.1} parent=5 // pred_region
      // Predicated region
      $region37: #{tpu_custom_call.1} parent=35 // pred_check
        %p258 = pneg %p35
      $region38: #{tpu_custom_call.1} parent=35 // pred_check_branch
        %260 = sbr.rel (%p258) target = $region40
      $region39: #{tpu_custom_call.1} parent=35 // pred_region
        %s261 = smul.u32 16, %s15
        %p262 = scmp.lt.s32.totalorder %s261, 31
        %s263 = scalar_select %p262, %s261, 31
        %s264 = smul.addr %s263, 8
        %s265 = scalar_lea.vmem %s0, %s264
        %s266 = smul.u32 16, %s15
      $region40: #{tpu_custom_call.1} parent=35 // pred_fallthru
        _
    $region36: #{tpu_custom_call.1} parent=5 // pred_fallthru
      _
    %p267 = scmp.le.s32.totalorder 1, %s15
    %p268 = scmp.lt.s32.totalorder %s15, 3
    %p269 = pnand %p267, %p268
    %p270 = pneg %p269
    // Predicated region
    $region41: #{tpu_custom_call.1} parent=5 // pred_check
      _
    $region42: #{tpu_custom_call.1} parent=5 // pred_check_branch
      %272 = sbr.rel (%p269) target = $region44
    $region43: #{tpu_custom_call.1} parent=5 // pred_region
      %s273 = ssub.s32 %s15, 1
      %s274 = smul.u32 16, %s20
      %p275 = scmp.lt.s32.totalorder %s274, 31
      %s276 = scalar_select %p275, %s274, 31
      %s277 = smul.addr %s276, 8
      %s278 = scalar_lea.vmem %s0, %s277
      %p279 = pneg %p41
      %p280 = pneg %p38
      %p281 = pneg %p62
      %p282 = pneg %p59
      %p283 = pneg %p83
      %p284 = pneg %p80
      %p285 = pneg %p104
      %p286 = pneg %p101
      %p287 = pneg %p125
      %p288 = pneg %p122
      %p289 = pneg %p146
      %p290 = pneg %p143
      %p291 = pneg %p172
      %p292 = pneg %p169
      %s293 = smul.u32 16, %s20
      %p294 = scmp.lt.s32.totalorder %s293, 31
      %s295 = scalar_select %p294, %s293, 31
      %s296 = smul.addr %s295, 8
      %s297 = scalar_lea.vmem %s6, %s296
      %p298 = pneg %p198
      %p299 = pneg %p195
      %s300 = smul.u32 16, %s20
      %p301 = scmp.lt.s32.totalorder %s300, 31
      %s302 = scalar_select %p301, %s300, 31
      %s303 = smul.addr %s302, 8
      %s304 = scalar_lea.vmem %s7, %s303
      %p305 = pneg %p224
      %p306 = pneg %p221
      %s307 = smul.u32 16, %s20
      %p308 = scmp.lt.s32.totalorder %s307, 31
      %s309 = scalar_select %p308, %s307, 31
      %s310 = smul.addr %s309, 8
      %s311 = scalar_lea.vmem %s8, %s310
      %s312 = smul.u32 16, %s20
      %p313 = scmp.lt.s32.totalorder %s312, 31
      %s314 = scalar_select %p313, %s312, 31
      %s315 = smul.addr %s314, 8
      %s316 = scalar_lea.vmem %s0, %s315
      %s317 = smul.u32 16, %s20
      %s318 = smul.u32 16, %s20
      %p319 = scmp.lt.s32.totalorder %s318, 31
      %s320 = scalar_select %p319, %s318, 31
      %s321 = smul.addr %s320, 8
      %s322 = scalar_lea.vmem %s6, %s321
      %s323 = smul.u32 16, %s20
      %s324 = smul.u32 16, %s20
      %p325 = scmp.lt.s32.totalorder %s324, 31
      %s326 = scalar_select %p325, %s324, 31
      %s327 = smul.addr %s326, 8
      %s328 = scalar_lea.vmem %s7, %s327
      %s329 = smul.u32 16, %s20
      %s330 = smul.u32 16, %s20
      %p331 = scmp.lt.s32.totalorder %s330, 31
      %s332 = scalar_select %p331, %s330, 31
      %s333 = smul.addr %s332, 8
      %s334 = scalar_lea.vmem %s8, %s333
      %s335 = smul.u32 16, %s20
      %v336 = vld [vmem:[%s316] sm:$0xff]
      %v337 = vld [vmem:[%s316 + $0x8] sm:$0xff]
      %v338 = vld [vmem:[%s316 + $0x10] sm:$0xff]
      %v339 = vld [vmem:[%s316 + $0x18] sm:$0xff]
      %v340 = vld [vmem:[%s316 + $0x20] sm:$0xff]
      %v341 = vld [vmem:[%s316 + $0x28] sm:$0xff]
      %v342 = vld [vmem:[%s316 + $0x30] sm:$0xff]
      %v343 = vld [vmem:[%s316 + $0x38] sm:$0xff]
      %v344 = vld [vmem:[%s316 + $0x40] sm:$0xff]
      %v345 = vld [vmem:[%s316 + $0x48] sm:$0xff]
      %v346 = vld [vmem:[%s316 + $0x50] sm:$0xff]
      %v347 = vld [vmem:[%s316 + $0x58] sm:$0xff]
      %v348 = vld [vmem:[%s316 + $0x60] sm:$0xff]
      %v349 = vld [vmem:[%s316 + $0x68] sm:$0xff]
      %v350 = vld [vmem:[%s316 + $0x70] sm:$0xff]
      %v351 = vld [vmem:[%s316 + $0x78] sm:$0xff]
      %v352 = vld [vmem:[%s1] sm:$0xf]
      %v353 = vld [vmem:[%s2] sm:$0x1]
      %v355 = vlaneseq
      %v356 = vshrl.u32 %v355, 7
      %v357 = vsub.s32 0, %v356
      %v358 = vrot.slane %v353, %v357
      %vm360 = vcmask 31744
      %v362 = vsel %vm360, %v336, 0
      %v365 = vsel %vm360, %v337, 0
      %v368 = vsel %vm360, %v338, 0
      %v371 = vsel %vm360, %v339, 0
      %v374 = vsel %vm360, %v340, 0
      %v377 = vsel %vm360, %v341, 0
      %v380 = vsel %vm360, %v342, 0
      %v383 = vsel %vm360, %v343, 0
      %v386 = vsel %vm360, %v344, 0
      %v389 = vsel %vm360, %v345, 0
      %v392 = vsel %vm360, %v346, 0
      %v395 = vsel %vm360, %v347, 0
      %v398 = vsel %vm360, %v348, 0
      %v401 = vsel %vm360, %v349, 0
      %v404 = vsel %vm360, %v350, 0
      %v407 = vsel %vm360, %v351, 0
      %vm409 = vcmask 1043456
      %v411 = vsel %vm409, %v352, 0
      %413 = vmatprep.subr.mxu0 0.0
      %414 = vmatpush1.msra.mxu0 %v411
      %415 = vmatprep.subr.mxu0 0.0
      %416 = vmatpush1.msra.mxu0 0.0
      %417 = vmatprep.subr.mxu0 0.0
      %418 = vmatpush1.msra.mxu0 0.0
      %419 = vmatprep.subr.mxu0 0.0
      %420 = vmatpush1.msra.mxu0 0.0
      %421 = vmatprep.subr.mxu0 0.0
      %422 = vmatpush1.msra.mxu0 0.0
      %423 = vmatprep.subr.mxu0 0.0
      %424 = vmatpush1.msra.mxu0 0.0
      %425 = vmatprep.subr.mxu0 0.0
      %426 = vmatpush1.msra.mxu0 0.0
      %427 = vmatprep.subr.mxu0 0.0
      %428 = vmatpush1.msra.mxu0 0.0
      %429 = vmatprep.subr.mxu0 0.0
      %430 = vmatpush1.msra.mxu0 0.0
      %431 = vmatprep.subr.mxu0 0.0
      %432 = vmatpush1.msra.mxu0 0.0
      %433 = vmatprep.subr.mxu0 0.0
      %434 = vmatpush1.msra.mxu0 0.0
      %435 = vmatprep.subr.mxu0 0.0
      %436 = vmatpush1.msra.mxu0 0.0
      %437 = vmatprep.subr.mxu0 0.0
      %438 = vmatpush1.msra.mxu0 0.0
      %439 = vmatprep.subr.mxu0 0.0
      %440 = vmatpush1.msra.mxu0 0.0
      %441 = vmatprep.subr.mxu0 0.0
      %442 = vmatpush1.msra.mxu0 0.0
      %443 = vmatprep.subr.mxu0 0.0
      %444 = vmatpush1.msra.mxu0 0.0
      %445 = vmatprep.subr.mxu0 0.0
      %446 = vmatpush1.msra.mxu0 0.0
      %447 = vmatprep.subr.mxu0 0.0
      %448 = vmatpush1.msra.mxu0 0.0
      %449 = vmatprep.subr.mxu0 0.0
      %450 = vmatpush1.msra.mxu0 0.0
      %451 = vmatprep.subr.mxu0 0.0
      %452 = vmatpush1.msra.mxu0 0.0
      %453 = vmatprep.subr.mxu0 0.0
      %454 = vmatpush1.msra.mxu0 0.0
      %455 = vmatprep.subr.mxu0 0.0
      %456 = vmatpush1.msra.mxu0 0.0
      %457 = vmatprep.subr.mxu0 0.0
      %458 = vmatpush1.msra.mxu0 0.0
      %459 = vmatprep.subr.mxu0 0.0
      %460 = vmatpush1.msra.mxu0 0.0
      %461 = vmatprep.subr.mxu0 0.0
      %462 = vmatpush1.msra.mxu0 0.0
      %463 = vmatprep.subr.mxu0 0.0
      %464 = vmatpush1.msra.mxu0 0.0
      %465 = vmatprep.subr.mxu0 0.0
      %466 = vmatpush1.msra.mxu0 0.0
      %467 = vmatprep.subr.mxu0 0.0
      %468 = vmatpush1.msra.mxu0 0.0
      %469 = vmatprep.subr.mxu0 0.0
      %470 = vmatpush1.msra.mxu0 0.0
      %471 = vmatprep.subr.mxu0 0.0
      %472 = vmatpush1.msra.mxu0 0.0
      %473 = vmatprep.subr.mxu0 0.0
      %474 = vmatpush1.msra.mxu0 0.0
      %475 = vmatprep.subr.mxu0 0.0
      %476 = vmatpush1.msra.mxu0 0.0
      %477 = vmatprep.mubr.f32.mxu0 0.0
      %478 = vmatmul.mubr.f32.gmra.mrb[0].mxu0 %v362
      %v479 = vpop.f32.mrb[0].mxu0
      %v480 = vadd.f32 %v358, %v479
      %v481 = vpop.f32.mrb[0].mxu0
      %482 = vmatprep.mubr.f32.mxu0 0.0
      %483 = vmatmul.mubr.f32.gmra.mrb[0].mxu0 %v365
      %v484 = vpop.f32.mrb[0].mxu0
      %v485 = vadd.f32 %v358, %v484
      %v486 = vpop.f32.mrb[0].mxu0
      %487 = vmatprep.mubr.f32.mxu0 0.0
      %488 = vmatmul.mubr.f32.gmra.mrb[0].mxu0 %v368
      %v489 = vpop.f32.mrb[0].mxu0
      %v490 = vadd.f32 %v358, %v489
      %v491 = vpop.f32.mrb[0].mxu0
      %492 = vmatprep.mubr.f32.mxu0 0.0
      %493 = vmatmul.mubr.f32.gmra.mrb[0].mxu0 %v371
      %v494 = vpop.f32.mrb[0].mxu0
      %v495 = vadd.f32 %v358, %v494
      %v496 = vpop.f32.mrb[0].mxu0
      %497 = vmatprep.mubr.f32.mxu0 0.0
      %498 = vmatmul.mubr.f32.gmra.mrb[0].mxu0 %v374
      %v499 = vpop.f32.mrb[0].mxu0
      %v500 = vadd.f32 %v358, %v499
      %v501 = vpop.f32.mrb[0].mxu0
      %502 = vmatprep.mubr.f32.mxu0 0.0
      %503 = vmatmul.mubr.f32.gmra.mrb[0].mxu0 %v377
      %v504 = vpop.f32.mrb[0].mxu0
      %v505 = vadd.f32 %v358, %v504
      %v506 = vpop.f32.mrb[0].mxu0
      %507 = vmatprep.mubr.f32.mxu0 0.0
      %508 = vmatmul.mubr.f32.gmra.mrb[0].mxu0 %v380
      %v509 = vpop.f32.mrb[0].mxu0
      %v510 = vadd.f32 %v358, %v509
      %v511 = vpop.f32.mrb[0].mxu0
      %512 = vmatprep.mubr.f32.mxu0 0.0
      %513 = vmatmul.mubr.f32.gmra.mrb[0].mxu0 %v383
      %v514 = vpop.f32.mrb[0].mxu0
      %v515 = vadd.f32 %v358, %v514
      %v516 = vpop.f32.mrb[0].mxu0
      %517 = vmatprep.mubr.f32.mxu0 0.0
      %518 = vmatmul.mubr.f32.gmra.mrb[0].mxu0 %v386
      %v519 = vpop.f32.mrb[0].mxu0
      %v520 = vadd.f32 %v358, %v519
      %v521 = vpop.f32.mrb[0].mxu0
      %522 = vmatprep.mubr.f32.mxu0 0.0
      %523 = vmatmul.mubr.f32.gmra.mrb[0].mxu0 %v389
      %v524 = vpop.f32.mrb[0].mxu0
      %v525 = vadd.f32 %v358, %v524
      %v526 = vpop.f32.mrb[0].mxu0
      %527 = vmatprep.mubr.f32.mxu0 0.0
      %528 = vmatmul.mubr.f32.gmra.mrb[0].mxu0 %v392
      %v529 = vpop.f32.mrb[0].mxu0
      %v530 = vadd.f32 %v358, %v529
      %v531 = vpop.f32.mrb[0].mxu0
      %532 = vmatprep.mubr.f32.mxu0 0.0
      %533 = vmatmul.mubr.f32.gmra.mrb[0].mxu0 %v395
      %v534 = vpop.f32.mrb[0].mxu0
      %v535 = vadd.f32 %v358, %v534
      %v536 = vpop.f32.mrb[0].mxu0
      %537 = vmatprep.mubr.f32.mxu0 0.0
      %538 = vmatmul.mubr.f32.gmra.mrb[0].mxu0 %v398
      %v539 = vpop.f32.mrb[0].mxu0
      %v540 = vadd.f32 %v358, %v539
      %v541 = vpop.f32.mrb[0].mxu0
      %542 = vmatprep.mubr.f32.mxu0 0.0
      %543 = vmatmul.mubr.f32.gmra.mrb[0].mxu0 %v401
      %v544 = vpop.f32.mrb[0].mxu0
      %v545 = vadd.f32 %v358, %v544
      %v546 = vpop.f32.mrb[0].mxu0
      %547 = vmatprep.mubr.f32.mxu0 0.0
      %548 = vmatmul.mubr.f32.gmra.mrb[0].mxu0 %v404
      %v549 = vpop.f32.mrb[0].mxu0
      %v550 = vadd.f32 %v358, %v549
      %v551 = vpop.f32.mrb[0].mxu0
      %552 = vmatprep.mubr.f32.mxu0 0.0
      %553 = vmatmul.mubr.f32.gmra.mrb[0].mxu0 %v407
      %v554 = vpop.f32.mrb[0].mxu0
      %v555 = vadd.f32 %v358, %v554
      %v556 = vpop.f32.mrb[0].mxu0
      %557 = vdwg.mxu0
      %vm558 = vcmp.gt.f32.partialorder %v480, 0.0
      %vm559 = vcmp.gt.f32.partialorder %v485, 0.0
      %vm560 = vcmp.gt.f32.partialorder %v490, 0.0
      %vm561 = vcmp.gt.f32.partialorder %v495, 0.0
      %vm562 = vcmp.gt.f32.partialorder %v500, 0.0
      %vm563 = vcmp.gt.f32.partialorder %v505, 0.0
      %vm564 = vcmp.gt.f32.partialorder %v510, 0.0
      %vm565 = vcmp.gt.f32.partialorder %v515, 0.0
      %vm566 = vcmp.gt.f32.partialorder %v520, 0.0
      %vm567 = vcmp.gt.f32.partialorder %v525, 0.0
      %vm568 = vcmp.gt.f32.partialorder %v530, 0.0
      %vm569 = vcmp.gt.f32.partialorder %v535, 0.0
      %vm570 = vcmp.gt.f32.partialorder %v540, 0.0
      %vm571 = vcmp.gt.f32.partialorder %v545, 0.0
      %vm572 = vcmp.gt.f32.partialorder %v550, 0.0
      %vm573 = vcmp.gt.f32.partialorder %v555, 0.0
      %v574 = vmin.f32 %v480, 0.0
      %v575 = vmin.f32 %v485, 0.0
      %v576 = vmin.f32 %v490, 0.0
      %v577 = vmin.f32 %v495, 0.0
      %v578 = vmin.f32 %v500, 0.0
      %v579 = vmin.f32 %v505, 0.0
      %v580 = vmin.f32 %v510, 0.0
      %v581 = vmin.f32 %v515, 0.0
      %v582 = vmin.f32 %v520, 0.0
      %v583 = vmin.f32 %v525, 0.0
      %v584 = vmin.f32 %v530, 0.0
      %v585 = vmin.f32 %v535, 0.0
      %v586 = vmin.f32 %v540, 0.0
      %v587 = vmin.f32 %v545, 0.0
      %v588 = vmin.f32 %v550, 0.0
      %v589 = vmin.f32 %v555, 0.0
      %v590 = vmul.f32 %v574, 1.442695
      %v591 = vpow.pop %v590
      %v592 = vmul.f32 %v575, 1.442695
      %v593 = vpow.pop %v592
      %v594 = vmul.f32 %v576, 1.442695
      %v595 = vpow.pop %v594
      %v596 = vmul.f32 %v577, 1.442695
      %v597 = vpow.pop %v596
      %v598 = vmul.f32 %v578, 1.442695
      %v599 = vpow.pop %v598
      %v600 = vmul.f32 %v579, 1.442695
      %v601 = vpow.pop %v600
      %v602 = vmul.f32 %v580, 1.442695
      %v603 = vpow.pop %v602
      %v604 = vmul.f32 %v581, 1.442695
      %v605 = vpow.pop %v604
      %v606 = vmul.f32 %v582, 1.442695
      %v607 = vpow.pop %v606
      %v608 = vmul.f32 %v583, 1.442695
      %v609 = vpow.pop %v608
      %v610 = vmul.f32 %v584, 1.442695
      %v611 = vpow.pop %v610
      %v612 = vmul.f32 %v585, 1.442695
      %v613 = vpow.pop %v612
      %v614 = vmul.f32 %v586, 1.442695
      %v615 = vpow.pop %v614
      %v616 = vmul.f32 %v587, 1.442695
      %v617 = vpow.pop %v616
      %v618 = vmul.f32 %v588, 1.442695
      %v619 = vpow.pop %v618
      %v620 = vmul.f32 %v589, 1.442695
      %v621 = vpow.pop %v620
      %v622 = vsub.f32 %v591, 1.0
      %v623 = vsub.f32 %v593, 1.0
      %v624 = vsub.f32 %v595, 1.0
      %v625 = vsub.f32 %v597, 1.0
      %v626 = vsub.f32 %v599, 1.0
      %v627 = vsub.f32 %v601, 1.0
      %v628 = vsub.f32 %v603, 1.0
      %v629 = vsub.f32 %v605, 1.0
      %v630 = vsub.f32 %v607, 1.0
      %v631 = vsub.f32 %v609, 1.0
      %v632 = vsub.f32 %v611, 1.0
      %v633 = vsub.f32 %v613, 1.0
      %v634 = vsub.f32 %v615, 1.0
      %v635 = vsub.f32 %v617, 1.0
      %v636 = vsub.f32 %v619, 1.0
      %v637 = vsub.f32 %v621, 1.0
      %v638 = vsel %vm558, %v480, %v622
      %v639 = vsel %vm559, %v485, %v623
      %v640 = vsel %vm560, %v490, %v624
      %v641 = vsel %vm561, %v495, %v625
      %v642 = vsel %vm562, %v500, %v626
      %v643 = vsel %vm563, %v505, %v627
      %v644 = vsel %vm564, %v510, %v628
      %v645 = vsel %vm565, %v515, %v629
      %v646 = vsel %vm566, %v520, %v630
      %v647 = vsel %vm567, %v525, %v631
      %v648 = vsel %vm568, %v530, %v632
      %v649 = vsel %vm569, %v535, %v633
      %v650 = vsel %vm570, %v540, %v634
      %v651 = vsel %vm571, %v545, %v635
      %v652 = vsel %vm572, %v550, %v636
      %v653 = vsel %vm573, %v555, %v637
      %v654 = vld [vmem:[%s3] sm:$0xff]
      %v655 = vld [vmem:[%s3 + $0x8] sm:$0xff]
      %v656 = vld [vmem:[%s3 + $0x10] sm:$0xff]
      %v657 = vld [vmem:[%s3 + $0x18] sm:$0xff]
      %v658 = vld [vmem:[%s4] sm:$0x1]
      %v660 = vlaneseq
      %v661 = vshrl.u32 %v660, 7
      %v662 = vsub.s32 0, %v661
      %v663 = vrot.slane %v658, %v662
      %vm665 = vcmask 261120
      %v667 = vsel %vm665, %v638, 0
      %v670 = vsel %vm665, %v639, 0
      %v673 = vsel %vm665, %v640, 0
      %v676 = vsel %vm665, %v641, 0
      %v679 = vsel %vm665, %v642, 0
      %v682 = vsel %vm665, %v643, 0
      %v685 = vsel %vm665, %v644, 0
      %v688 = vsel %vm665, %v645, 0
      %v691 = vsel %vm665, %v646, 0
      %v694 = vsel %vm665, %v647, 0
      %v697 = vsel %vm665, %v648, 0
      %v700 = vsel %vm665, %v649, 0
      %v703 = vsel %vm665, %v650, 0
      %v706 = vsel %vm665, %v651, 0
      %v709 = vsel %vm665, %v652, 0
      %v712 = vsel %vm665, %v653, 0
      %714 = vmatprep.subr.mxu0 0.0
      %715 = vmatpush1.msra.mxu0 %v654
      %716 = vmatprep.subr.mxu0 0.0
      %717 = vmatpush1.msra.mxu0 %v655
      %718 = vmatprep.subr.mxu0 0.0
      %719 = vmatpush1.msra.mxu0 %v656
      %720 = vmatprep.subr.mxu0 0.0
      %721 = vmatpush1.msra.mxu0 %v657
      %722 = vmatprep.subr.mxu0 0.0
      %723 = vmatpush1.msra.mxu0 0.0
      %724 = vmatprep.subr.mxu0 0.0
      %725 = vmatpush1.msra.mxu0 0.0
      %726 = vmatprep.subr.mxu0 0.0
      %727 = vmatpush1.msra.mxu0 0.0
      %728 = vmatprep.subr.mxu0 0.0
      %729 = vmatpush1.msra.mxu0 0.0
      %730 = vmatprep.subr.mxu0 0.0
      %731 = vmatpush1.msra.mxu0 0.0
      %732 = vmatprep.subr.mxu0 0.0
      %733 = vmatpush1.msra.mxu0 0.0
      %734 = vmatprep.subr.mxu0 0.0
      %735 = vmatpush1.msra.mxu0 0.0
      %736 = vmatprep.subr.mxu0 0.0
      %737 = vmatpush1.msra.mxu0 0.0
      %738 = vmatprep.subr.mxu0 0.0
      %739 = vmatpush1.msra.mxu0 0.0
      %740 = vmatprep.subr.mxu0 0.0
      %741 = vmatpush1.msra.mxu0 0.0
      %742 = vmatprep.subr.mxu0 0.0
      %743 = vmatpush1.msra.mxu0 0.0
      %744 = vmatprep.subr.mxu0 0.0
      %745 = vmatpush1.msra.mxu0 0.0
      %746 = vmatprep.subr.mxu0 0.0
      %747 = vmatpush1.msra.mxu0 0.0
      %748 = vmatprep.subr.mxu0 0.0
      %749 = vmatpush1.msra.mxu0 0.0
      %750 = vmatprep.subr.mxu0 0.0
      %751 = vmatpush1.msra.mxu0 0.0
      %752 = vmatprep.subr.mxu0 0.0
      %753 = vmatpush1.msra.mxu0 0.0
      %754 = vmatprep.subr.mxu0 0.0
      %755 = vmatpush1.msra.mxu0 0.0
      %756 = vmatprep.subr.mxu0 0.0
      %757 = vmatpush1.msra.mxu0 0.0
      %758 = vmatprep.subr.mxu0 0.0
      %759 = vmatpush1.msra.mxu0 0.0
      %760 = vmatprep.subr.mxu0 0.0
      %761 = vmatpush1.msra.mxu0 0.0
      %762 = vmatprep.subr.mxu0 0.0
      %763 = vmatpush1.msra.mxu0 0.0
      %764 = vmatprep.subr.mxu0 0.0
      %765 = vmatpush1.msra.mxu0 0.0
      %766 = vmatprep.subr.mxu0 0.0
      %767 = vmatpush1.msra.mxu0 0.0
      %768 = vmatprep.subr.mxu0 0.0
      %769 = vmatpush1.msra.mxu0 0.0
      %770 = vmatprep.subr.mxu0 0.0
      %771 = vmatpush1.msra.mxu0 0.0
      %772 = vmatprep.subr.mxu0 0.0
      %773 = vmatpush1.msra.mxu0 0.0
      %774 = vmatprep.subr.mxu0 0.0
      %775 = vmatpush1.msra.mxu0 0.0
      %776 = vmatprep.subr.mxu0 0.0
      %777 = vmatpush1.msra.mxu0 0.0
      %778 = vmatprep.mubr.f32.mxu0 0.0
      %779 = vmatmul.mubr.f32.gmra.mrb[0].mxu0 %v667
      %v780 = vpop.f32.mrb[0].mxu0
      %v781 = vadd.f32 %v663, %v780
      %v782 = vpop.f32.mrb[0].mxu0
      %783 = vmatprep.mubr.f32.mxu0 0.0
      %784 = vmatmul.mubr.f32.gmra.mrb[0].mxu0 %v670
      %v785 = vpop.f32.mrb[0].mxu0
      %v786 = vadd.f32 %v663, %v785
      %v787 = vpop.f32.mrb[0].mxu0
      %788 = vmatprep.mubr.f32.mxu0 0.0
      %789 = vmatmul.mubr.f32.gmra.mrb[0].mxu0 %v673
      %v790 = vpop.f32.mrb[0].mxu0
      %v791 = vadd.f32 %v663, %v790
      %v792 = vpop.f32.mrb[0].mxu0
      %793 = vmatprep.mubr.f32.mxu0 0.0
      %794 = vmatmul.mubr.f32.gmra.mrb[0].mxu0 %v676
      %v795 = vpop.f32.mrb[0].mxu0
      %v796 = vadd.f32 %v663, %v795
      %v797 = vpop.f32.mrb[0].mxu0
      %798 = vmatprep.mubr.f32.mxu0 0.0
      %799 = vmatmul.mubr.f32.gmra.mrb[0].mxu0 %v679
      %v800 = vpop.f32.mrb[0].mxu0
      %v801 = vadd.f32 %v663, %v800
      %v802 = vpop.f32.mrb[0].mxu0
      %803 = vmatprep.mubr.f32.mxu0 0.0
      %804 = vmatmul.mubr.f32.gmra.mrb[0].mxu0 %v682
      %v805 = vpop.f32.mrb[0].mxu0
      %v806 = vadd.f32 %v663, %v805
      %v807 = vpop.f32.mrb[0].mxu0
      %808 = vmatprep.mubr.f32.mxu0 0.0
      %809 = vmatmul.mubr.f32.gmra.mrb[0].mxu0 %v685
      %v810 = vpop.f32.mrb[0].mxu0
      %v811 = vadd.f32 %v663, %v810
      %v812 = vpop.f32.mrb[0].mxu0
      %813 = vmatprep.mubr.f32.mxu0 0.0
      %814 = vmatmul.mubr.f32.gmra.mrb[0].mxu0 %v688
      %v815 = vpop.f32.mrb[0].mxu0
      %v816 = vadd.f32 %v663, %v815
      %v817 = vpop.f32.mrb[0].mxu0
      %818 = vmatprep.mubr.f32.mxu0 0.0
      %819 = vmatmul.mubr.f32.gmra.mrb[0].mxu0 %v691
      %v820 = vpop.f32.mrb[0].mxu0
      %v821 = vadd.f32 %v663, %v820
      %v822 = vpop.f32.mrb[0].mxu0
      %823 = vmatprep.mubr.f32.mxu0 0.0
      %824 = vmatmul.mubr.f32.gmra.mrb[0].mxu0 %v694
      %v825 = vpop.f32.mrb[0].mxu0
      %v826 = vadd.f32 %v663, %v825
      %v827 = vpop.f32.mrb[0].mxu0
      %828 = vmatprep.mubr.f32.mxu0 0.0
      %829 = vmatmul.mubr.f32.gmra.mrb[0].mxu0 %v697
      %v830 = vpop.f32.mrb[0].mxu0
      %v831 = vadd.f32 %v663, %v830
      %v832 = vpop.f32.mrb[0].mxu0
      %833 = vmatprep.mubr.f32.mxu0 0.0
      %834 = vmatmul.mubr.f32.gmra.mrb[0].mxu0 %v700
      %v835 = vpop.f32.mrb[0].mxu0
      %v836 = vadd.f32 %v663, %v835
      %v837 = vpop.f32.mrb[0].mxu0
      %838 = vmatprep.mubr.f32.mxu0 0.0
      %839 = vmatmul.mubr.f32.gmra.mrb[0].mxu0 %v703
      %v840 = vpop.f32.mrb[0].mxu0
      %v841 = vadd.f32 %v663, %v840
      %v842 = vpop.f32.mrb[0].mxu0
      %843 = vmatprep.mubr.f32.mxu0 0.0
      %844 = vmatmul.mubr.f32.gmra.mrb[0].mxu0 %v706
      %v845 = vpop.f32.mrb[0].mxu0
      %v846 = vadd.f32 %v663, %v845
      %v847 = vpop.f32.mrb[0].mxu0
      %848 = vmatprep.mubr.f32.mxu0 0.0
      %849 = vmatmul.mubr.f32.gmra.mrb[0].mxu0 %v709
      %v850 = vpop.f32.mrb[0].mxu0
      %v851 = vadd.f32 %v663, %v850
      %v852 = vpop.f32.mrb[0].mxu0
      %853 = vmatprep.mubr.f32.mxu0 0.0
      %854 = vmatmul.mubr.f32.gmra.mrb[0].mxu0 %v712
      %v855 = vpop.f32.mrb[0].mxu0
      %v856 = vadd.f32 %v663, %v855
      %v857 = vpop.f32.mrb[0].mxu0
      %858 = vdwg.mxu0
      %vm859 = vcmp.gt.f32.partialorder %v781, 0.0
      %vm860 = vcmp.gt.f32.partialorder %v786, 0.0
      %vm861 = vcmp.gt.f32.partialorder %v791, 0.0
      %vm862 = vcmp.gt.f32.partialorder %v796, 0.0
      %vm863 = vcmp.gt.f32.partialorder %v801, 0.0
      %vm864 = vcmp.gt.f32.partialorder %v806, 0.0
      %vm865 = vcmp.gt.f32.partialorder %v811, 0.0
      %vm866 = vcmp.gt.f32.partialorder %v816, 0.0
      %vm867 = vcmp.gt.f32.partialorder %v821, 0.0
      %vm868 = vcmp.gt.f32.partialorder %v826, 0.0
      %vm869 = vcmp.gt.f32.partialorder %v831, 0.0
      %vm870 = vcmp.gt.f32.partialorder %v836, 0.0
      %vm871 = vcmp.gt.f32.partialorder %v841, 0.0
      %vm872 = vcmp.gt.f32.partialorder %v846, 0.0
      %vm873 = vcmp.gt.f32.partialorder %v851, 0.0
      %vm874 = vcmp.gt.f32.partialorder %v856, 0.0
      %v875 = vmin.f32 %v781, 0.0
      %v876 = vmin.f32 %v786, 0.0
      %v877 = vmin.f32 %v791, 0.0
      %v878 = vmin.f32 %v796, 0.0
      %v879 = vmin.f32 %v801, 0.0
      %v880 = vmin.f32 %v806, 0.0
      %v881 = vmin.f32 %v811, 0.0
      %v882 = vmin.f32 %v816, 0.0
      %v883 = vmin.f32 %v821, 0.0
      %v884 = vmin.f32 %v826, 0.0
      %v885 = vmin.f32 %v831, 0.0
      %v886 = vmin.f32 %v836, 0.0
      %v887 = vmin.f32 %v841, 0.0
      %v888 = vmin.f32 %v846, 0.0
      %v889 = vmin.f32 %v851, 0.0
      %v890 = vmin.f32 %v856, 0.0
      %v891 = vmul.f32 %v875, 1.442695
      %v892 = vpow.pop %v891
      %v893 = vmul.f32 %v876, 1.442695
      %v894 = vpow.pop %v893
      %v895 = vmul.f32 %v877, 1.442695
      %v896 = vpow.pop %v895
      %v897 = vmul.f32 %v878, 1.442695
      %v898 = vpow.pop %v897
      %v899 = vmul.f32 %v879, 1.442695
      %v900 = vpow.pop %v899
      %v901 = vmul.f32 %v880, 1.442695
      %v902 = vpow.pop %v901
      %v903 = vmul.f32 %v881, 1.442695
      %v904 = vpow.pop %v903
      %v905 = vmul.f32 %v882, 1.442695
      %v906 = vpow.pop %v905
      %v907 = vmul.f32 %v883, 1.442695
      %v908 = vpow.pop %v907
      %v909 = vmul.f32 %v884, 1.442695
      %v910 = vpow.pop %v909
      %v911 = vmul.f32 %v885, 1.442695
      %v912 = vpow.pop %v911
      %v913 = vmul.f32 %v886, 1.442695
      %v914 = vpow.pop %v913
      %v915 = vmul.f32 %v887, 1.442695
      %v916 = vpow.pop %v915
      %v917 = vmul.f32 %v888, 1.442695
      %v918 = vpow.pop %v917
      %v919 = vmul.f32 %v889, 1.442695
      %v920 = vpow.pop %v919
      %v921 = vmul.f32 %v890, 1.442695
      %v922 = vpow.pop %v921
      %v923 = vsub.f32 %v892, 1.0
      %v924 = vsub.f32 %v894, 1.0
      %v925 = vsub.f32 %v896, 1.0
      %v926 = vsub.f32 %v898, 1.0
      %v927 = vsub.f32 %v900, 1.0
      %v928 = vsub.f32 %v902, 1.0
      %v929 = vsub.f32 %v904, 1.0
      %v930 = vsub.f32 %v906, 1.0
      %v931 = vsub.f32 %v908, 1.0
      %v932 = vsub.f32 %v910, 1.0
      %v933 = vsub.f32 %v912, 1.0
      %v934 = vsub.f32 %v914, 1.0
      %v935 = vsub.f32 %v916, 1.0
      %v936 = vsub.f32 %v918, 1.0
      %v937 = vsub.f32 %v920, 1.0
      %v938 = vsub.f32 %v922, 1.0
      %v939 = vsel %vm859, %v781, %v923
      %v940 = vsel %vm860, %v786, %v924
      %v941 = vsel %vm861, %v791, %v925
      %v942 = vsel %vm862, %v796, %v926
      %v943 = vsel %vm863, %v801, %v927
      %v944 = vsel %vm864, %v806, %v928
      %v945 = vsel %vm865, %v811, %v929
      %v946 = vsel %vm866, %v816, %v930
      %v947 = vsel %vm867, %v821, %v931
      %v948 = vsel %vm868, %v826, %v932
      %v949 = vsel %vm869, %v831, %v933
      %v950 = vsel %vm870, %v836, %v934
      %v951 = vsel %vm871, %v841, %v935
      %v952 = vsel %vm872, %v846, %v936
      %v953 = vsel %vm873, %v851, %v937
      %v954 = vsel %vm874, %v856, %v938
      %955 = vst.msk [vmem:[%s322] sm:$0xff] %vm665, %v939
      %956 = vst.msk [vmem:[%s322 + $0x8] sm:$0xff] %vm665, %v940
      %957 = vst.msk [vmem:[%s322 + $0x10] sm:$0xff] %vm665, %v941
      %958 = vst.msk [vmem:[%s322 + $0x18] sm:$0xff] %vm665, %v942
      %959 = vst.msk [vmem:[%s322 + $0x20] sm:$0xff] %vm665, %v943
      %960 = vst.msk [vmem:[%s322 + $0x28] sm:$0xff] %vm665, %v944
      %961 = vst.msk [vmem:[%s322 + $0x30] sm:$0xff] %vm665, %v945
      %962 = vst.msk [vmem:[%s322 + $0x38] sm:$0xff] %vm665, %v946
      %963 = vst.msk [vmem:[%s322 + $0x40] sm:$0xff] %vm665, %v947
      %964 = vst.msk [vmem:[%s322 + $0x48] sm:$0xff] %vm665, %v948
      %965 = vst.msk [vmem:[%s322 + $0x50] sm:$0xff] %vm665, %v949
      %966 = vst.msk [vmem:[%s322 + $0x58] sm:$0xff] %vm665, %v950
      %967 = vst.msk [vmem:[%s322 + $0x60] sm:$0xff] %vm665, %v951
      %968 = vst.msk [vmem:[%s322 + $0x68] sm:$0xff] %vm665, %v952
      %969 = vst.msk [vmem:[%s322 + $0x70] sm:$0xff] %vm665, %v953
      %970 = vst.msk [vmem:[%s322 + $0x78] sm:$0xff] %vm665, %v954
      %v971 = vld [vmem:[%s5] sm:$0xff]
      %v972 = vld [vmem:[%s5 + $0x8] sm:$0xff]
      %v973 = vld [vmem:[%s5 + $0x10] sm:$0xff]
      %v974 = vld [vmem:[%s5 + $0x18] sm:$0xff]
      %v976 = vsel %vm665, %v939, 0
      %v979 = vsel %vm665, %v940, 0
      %v982 = vsel %vm665, %v941, 0
      %v985 = vsel %vm665, %v942, 0
      %v988 = vsel %vm665, %v943, 0
      %v991 = vsel %vm665, %v944, 0
      %v994 = vsel %vm665, %v945, 0
      %v997 = vsel %vm665, %v946, 0
      %v1000 = vsel %vm665, %v947, 0
      %v1003 = vsel %vm665, %v948, 0
      %v1006 = vsel %vm665, %v949, 0
      %v1009 = vsel %vm665, %v950, 0
      %v1012 = vsel %vm665, %v951, 0
      %v1015 = vsel %vm665, %v952, 0
      %v1018 = vsel %vm665, %v953, 0
      %v1021 = vsel %vm665, %v954, 0
      %1023 = vmatprep.subr.mxu0 0.0
      %1024 = vmatpush1.msra.mxu0 %v971
      %1025 = vmatprep.subr.mxu0 0.0
      %1026 = vmatpush1.msra.mxu0 %v972
      %1027 = vmatprep.subr.mxu0 0.0
      %1028 = vmatpush1.msra.mxu0 %v973
      %1029 = vmatprep.subr.mxu0 0.0
      %1030 = vmatpush1.msra.mxu0 %v974
      %1031 = vmatprep.subr.mxu0 0.0
      %1032 = vmatpush1.msra.mxu0 0.0
      %1033 = vmatprep.subr.mxu0 0.0
      %1034 = vmatpush1.msra.mxu0 0.0
      %1035 = vmatprep.subr.mxu0 0.0
      %1036 = vmatpush1.msra.mxu0 0.0
      %1037 = vmatprep.subr.mxu0 0.0
      %1038 = vmatpush1.msra.mxu0 0.0
      %1039 = vmatprep.subr.mxu0 0.0
      %1040 = vmatpush1.msra.mxu0 0.0
      %1041 = vmatprep.subr.mxu0 0.0
      %1042 = vmatpush1.msra.mxu0 0.0
      %1043 = vmatprep.subr.mxu0 0.0
      %1044 = vmatpush1.msra.mxu0 0.0
      %1045 = vmatprep.subr.mxu0 0.0
      %1046 = vmatpush1.msra.mxu0 0.0
      %1047 = vmatprep.subr.mxu0 0.0
      %1048 = vmatpush1.msra.mxu0 0.0
      %1049 = vmatprep.subr.mxu0 0.0
      %1050 = vmatpush1.msra.mxu0 0.0
      %1051 = vmatprep.subr.mxu0 0.0
      %1052 = vmatpush1.msra.mxu0 0.0
      %1053 = vmatprep.subr.mxu0 0.0
      %1054 = vmatpush1.msra.mxu0 0.0
      %1055 = vmatprep.subr.mxu0 0.0
      %1056 = vmatpush1.msra.mxu0 0.0
      %1057 = vmatprep.subr.mxu0 0.0
      %1058 = vmatpush1.msra.mxu0 0.0
      %1059 = vmatprep.subr.mxu0 0.0
      %1060 = vmatpush1.msra.mxu0 0.0
      %1061 = vmatprep.subr.mxu0 0.0
      %1062 = vmatpush1.msra.mxu0 0.0
      %1063 = vmatprep.subr.mxu0 0.0
      %1064 = vmatpush1.msra.mxu0 0.0
      %1065 = vmatprep.subr.mxu0 0.0
      %1066 = vmatpush1.msra.mxu0 0.0
      %1067 = vmatprep.subr.mxu0 0.0
      %1068 = vmatpush1.msra.mxu0 0.0
      %1069 = vmatprep.subr.mxu0 0.0
      %1070 = vmatpush1.msra.mxu0 0.0
      %1071 = vmatprep.subr.mxu0 0.0
      %1072 = vmatpush1.msra.mxu0 0.0
      %1073 = vmatprep.subr.mxu0 0.0
      %1074 = vmatpush1.msra.mxu0 0.0
      %1075 = vmatprep.subr.mxu0 0.0
      %1076 = vmatpush1.msra.mxu0 0.0
      %1077 = vmatprep.subr.mxu0 0.0
      %1078 = vmatpush1.msra.mxu0 0.0
      %1079 = vmatprep.subr.mxu0 0.0
      %1080 = vmatpush1.msra.mxu0 0.0
      %1081 = vmatprep.subr.mxu0 0.0
      %1082 = vmatpush1.msra.mxu0 0.0
      %1083 = vmatprep.subr.mxu0 0.0
      %1084 = vmatpush1.msra.mxu0 0.0
      %1085 = vmatprep.subr.mxu0 0.0
      %1086 = vmatpush1.msra.mxu0 0.0
      %1087 = vmatprep.mubr.f32.mxu0 0.0
      %1088 = vmatmul.mubr.f32.gmra.mrb[0].mxu0 %v976
      %v1089 = vpop.f32.mrb[0].mxu0
      %v1090 = vadd.f32 0.0, %v1089
      %v1091 = vpop.f32.mrb[0].mxu0
      %1092 = vmatprep.mubr.f32.mxu0 0.0
      %1093 = vmatmul.mubr.f32.gmra.mrb[0].mxu0 %v979
      %v1094 = vpop.f32.mrb[0].mxu0
      %v1095 = vadd.f32 0.0, %v1094
      %v1096 = vpop.f32.mrb[0].mxu0
      %1097 = vmatprep.mubr.f32.mxu0 0.0
      %1098 = vmatmul.mubr.f32.gmra.mrb[0].mxu0 %v982
      %v1099 = vpop.f32.mrb[0].mxu0
      %v1100 = vadd.f32 0.0, %v1099
      %v1101 = vpop.f32.mrb[0].mxu0
      %1102 = vmatprep.mubr.f32.mxu0 0.0
      %1103 = vmatmul.mubr.f32.gmra.mrb[0].mxu0 %v985
      %v1104 = vpop.f32.mrb[0].mxu0
      %v1105 = vadd.f32 0.0, %v1104
      %v1106 = vpop.f32.mrb[0].mxu0
      %1107 = vmatprep.mubr.f32.mxu0 0.0
      %1108 = vmatmul.mubr.f32.gmra.mrb[0].mxu0 %v988
      %v1109 = vpop.f32.mrb[0].mxu0
      %v1110 = vadd.f32 0.0, %v1109
      %v1111 = vpop.f32.mrb[0].mxu0
      %1112 = vmatprep.mubr.f32.mxu0 0.0
      %1113 = vmatmul.mubr.f32.gmra.mrb[0].mxu0 %v991
      %v1114 = vpop.f32.mrb[0].mxu0
      %v1115 = vadd.f32 0.0, %v1114
      %v1116 = vpop.f32.mrb[0].mxu0
      %1117 = vmatprep.mubr.f32.mxu0 0.0
      %1118 = vmatmul.mubr.f32.gmra.mrb[0].mxu0 %v994
      %v1119 = vpop.f32.mrb[0].mxu0
      %v1120 = vadd.f32 0.0, %v1119
      %v1121 = vpop.f32.mrb[0].mxu0
      %1122 = vmatprep.mubr.f32.mxu0 0.0
      %1123 = vmatmul.mubr.f32.gmra.mrb[0].mxu0 %v997
      %v1124 = vpop.f32.mrb[0].mxu0
      %v1125 = vadd.f32 0.0, %v1124
      %v1126 = vpop.f32.mrb[0].mxu0
      %1127 = vmatprep.mubr.f32.mxu0 0.0
      %1128 = vmatmul.mubr.f32.gmra.mrb[0].mxu0 %v1000
      %v1129 = vpop.f32.mrb[0].mxu0
      %v1130 = vadd.f32 0.0, %v1129
      %v1131 = vpop.f32.mrb[0].mxu0
      %1132 = vmatprep.mubr.f32.mxu0 0.0
      %1133 = vmatmul.mubr.f32.gmra.mrb[0].mxu0 %v1003
      %v1134 = vpop.f32.mrb[0].mxu0
      %v1135 = vadd.f32 0.0, %v1134
      %v1136 = vpop.f32.mrb[0].mxu0
      %1137 = vmatprep.mubr.f32.mxu0 0.0
      %1138 = vmatmul.mubr.f32.gmra.mrb[0].mxu0 %v1006
      %v1139 = vpop.f32.mrb[0].mxu0
      %v1140 = vadd.f32 0.0, %v1139
      %v1141 = vpop.f32.mrb[0].mxu0
      %1142 = vmatprep.mubr.f32.mxu0 0.0
      %1143 = vmatmul.mubr.f32.gmra.mrb[0].mxu0 %v1009
      %v1144 = vpop.f32.mrb[0].mxu0
      %v1145 = vadd.f32 0.0, %v1144
      %v1146 = vpop.f32.mrb[0].mxu0
      %1147 = vmatprep.mubr.f32.mxu0 0.0
      %1148 = vmatmul.mubr.f32.gmra.mrb[0].mxu0 %v1012
      %v1149 = vpop.f32.mrb[0].mxu0
      %v1150 = vadd.f32 0.0, %v1149
      %v1151 = vpop.f32.mrb[0].mxu0
      %1152 = vmatprep.mubr.f32.mxu0 0.0
      %1153 = vmatmul.mubr.f32.gmra.mrb[0].mxu0 %v1015
      %v1154 = vpop.f32.mrb[0].mxu0
      %v1155 = vadd.f32 0.0, %v1154
      %v1156 = vpop.f32.mrb[0].mxu0
      %1157 = vmatprep.mubr.f32.mxu0 0.0
      %1158 = vmatmul.mubr.f32.gmra.mrb[0].mxu0 %v1018
      %v1159 = vpop.f32.mrb[0].mxu0
      %v1160 = vadd.f32 0.0, %v1159
      %v1161 = vpop.f32.mrb[0].mxu0
      %1162 = vmatprep.mubr.f32.mxu0 0.0
      %1163 = vmatmul.mubr.f32.gmra.mrb[0].mxu0 %v1021
      %v1164 = vpop.f32.mrb[0].mxu0
      %v1165 = vadd.f32 0.0, %v1164
      %v1166 = vpop.f32.mrb[0].mxu0
      %1167 = vdwg.mxu0
      %1168 = vst.msk [vmem:[%s328] sm:$0xff] %vm665, %v1090
      %1169 = vst.msk [vmem:[%s328 + $0x8] sm:$0xff] %vm665, %v1095
      %1170 = vst.msk [vmem:[%s328 + $0x10] sm:$0xff] %vm665, %v1100
      %1171 = vst.msk [vmem:[%s328 + $0x18] sm:$0xff] %vm665, %v1105
      %1172 = vst.msk [vmem:[%s328 + $0x20] sm:$0xff] %vm665, %v1110
      %1173 = vst.msk [vmem:[%s328 + $0x28] sm:$0xff] %vm665, %v1115
      %1174 = vst.msk [vmem:[%s328 + $0x30] sm:$0xff] %vm665, %v1120
      %1175 = vst.msk [vmem:[%s328 + $0x38] sm:$0xff] %vm665, %v1125
      %1176 = vst.msk [vmem:[%s328 + $0x40] sm:$0xff] %vm665, %v1130
      %1177 = vst.msk [vmem:[%s328 + $0x48] sm:$0xff] %vm665, %v1135
      %1178 = vst.msk [vmem:[%s328 + $0x50] sm:$0xff] %vm665, %v1140
      %1179 = vst.msk [vmem:[%s328 + $0x58] sm:$0xff] %vm665, %v1145
      %1180 = vst.msk [vmem:[%s328 + $0x60] sm:$0xff] %vm665, %v1150
      %1181 = vst.msk [vmem:[%s328 + $0x68] sm:$0xff] %vm665, %v1155
      %1182 = vst.msk [vmem:[%s328 + $0x70] sm:$0xff] %vm665, %v1160
      %1183 = vst.msk [vmem:[%s328 + $0x78] sm:$0xff] %vm665, %v1165
      %v1184 = vmul.f32 %v939, %v939
      %v1185 = vmul.f32 %v940, %v940
      %v1186 = vmul.f32 %v941, %v941
      %v1187 = vmul.f32 %v942, %v942
      %v1188 = vmul.f32 %v943, %v943
      %v1189 = vmul.f32 %v944, %v944
      %v1190 = vmul.f32 %v945, %v945
      %v1191 = vmul.f32 %v946, %v946
      %v1192 = vmul.f32 %v947, %v947
      %v1193 = vmul.f32 %v948, %v948
      %v1194 = vmul.f32 %v949, %v949
      %v1195 = vmul.f32 %v950, %v950
      %v1196 = vmul.f32 %v951, %v951
      %v1197 = vmul.f32 %v952, %v952
      %v1198 = vmul.f32 %v953, %v953
      %v1199 = vmul.f32 %v954, %v954
      %v1200 = vsel %vm665, %v1184, 0.0
      %1201 = vadd.xlane.f32.xlu0 %v1200
      %v1202 = vpop.xlane.xlu0 %1201
      %v1203 = vsel %vm665, %v1185, 0.0
      %1204 = vadd.xlane.f32.xlu0 %v1203
      %v1205 = vpop.xlane.xlu0 %1204
      %v1206 = vsel %vm665, %v1186, 0.0
      %1207 = vadd.xlane.f32.xlu0 %v1206
      %v1208 = vpop.xlane.xlu0 %1207
      %v1209 = vsel %vm665, %v1187, 0.0
      %1210 = vadd.xlane.f32.xlu0 %v1209
      %v1211 = vpop.xlane.xlu0 %1210
      %v1212 = vsel %vm665, %v1188, 0.0
      %1213 = vadd.xlane.f32.xlu0 %v1212
      %v1214 = vpop.xlane.xlu0 %1213
      %v1215 = vsel %vm665, %v1189, 0.0
      %1216 = vadd.xlane.f32.xlu0 %v1215
      %v1217 = vpop.xlane.xlu0 %1216
      %v1218 = vsel %vm665, %v1190, 0.0
      %1219 = vadd.xlane.f32.xlu0 %v1218
      %v1220 = vpop.xlane.xlu0 %1219
      %v1221 = vsel %vm665, %v1191, 0.0
      %1222 = vadd.xlane.f32.xlu0 %v1221
      %v1223 = vpop.xlane.xlu0 %1222
      %v1224 = vsel %vm665, %v1192, 0.0
      %1225 = vadd.xlane.f32.xlu0 %v1224
      %v1226 = vpop.xlane.xlu0 %1225
      %v1227 = vsel %vm665, %v1193, 0.0
      %1228 = vadd.xlane.f32.xlu0 %v1227
      %v1229 = vpop.xlane.xlu0 %1228
      %v1230 = vsel %vm665, %v1194, 0.0
      %1231 = vadd.xlane.f32.xlu0 %v1230
      %v1232 = vpop.xlane.xlu0 %1231
      %v1233 = vsel %vm665, %v1195, 0.0
      %1234 = vadd.xlane.f32.xlu0 %v1233
      %v1235 = vpop.xlane.xlu0 %1234
      %v1236 = vsel %vm665, %v1196, 0.0
      %1237 = vadd.xlane.f32.xlu0 %v1236
      %v1238 = vpop.xlane.xlu0 %1237
      %v1239 = vsel %vm665, %v1197, 0.0
      %1240 = vadd.xlane.f32.xlu0 %v1239
      %v1241 = vpop.xlane.xlu0 %1240
      %v1242 = vsel %vm665, %v1198, 0.0
      %1243 = vadd.xlane.f32.xlu0 %v1242
      %v1244 = vpop.xlane.xlu0 %1243
      %v1245 = vsel %vm665, %v1199, 0.0
      %1246 = vadd.xlane.f32.xlu0 %v1245
      %v1247 = vpop.xlane.xlu0 %1246
      %vm1248 = vcmask 7168
      %1249 = vst.msk [vmem:[%s334] sm:$0xff] %vm1248, %v1202
      %1250 = vst.msk [vmem:[%s334 + $0x8] sm:$0xff] %vm1248, %v1205
      %1251 = vst.msk [vmem:[%s334 + $0x10] sm:$0xff] %vm1248, %v1208
      %1252 = vst.msk [vmem:[%s334 + $0x18] sm:$0xff] %vm1248, %v1211
      %1253 = vst.msk [vmem:[%s334 + $0x20] sm:$0xff] %vm1248, %v1214
      %1254 = vst.msk [vmem:[%s334 + $0x28] sm:$0xff] %vm1248, %v1217
      %1255 = vst.msk [vmem:[%s334 + $0x30] sm:$0xff] %vm1248, %v1220
      %1256 = vst.msk [vmem:[%s334 + $0x38] sm:$0xff] %vm1248, %v1223
      %1257 = vst.msk [vmem:[%s334 + $0x40] sm:$0xff] %vm1248, %v1226
      %1258 = vst.msk [vmem:[%s334 + $0x48] sm:$0xff] %vm1248, %v1229
      %1259 = vst.msk [vmem:[%s334 + $0x50] sm:$0xff] %vm1248, %v1232
      %1260 = vst.msk [vmem:[%s334 + $0x58] sm:$0xff] %vm1248, %v1235
      %1261 = vst.msk [vmem:[%s334 + $0x60] sm:$0xff] %vm1248, %v1238
      %1262 = vst.msk [vmem:[%s334 + $0x68] sm:$0xff] %vm1248, %v1241
      %1263 = vst.msk [vmem:[%s334 + $0x70] sm:$0xff] %vm1248, %v1244
      %1264 = vst.msk [vmem:[%s334 + $0x78] sm:$0xff] %vm1248, %v1247
      %s1265 = smul.u32 16, %s20
      %p1266 = scmp.lt.s32.totalorder %s1265, 31
      %s1267 = scalar_select %p1266, %s1265, 31
      %s1268 = smul.addr %s1267, 8
      %s1269 = scalar_lea.vmem %s6, %s1268
      %s1270 = smul.u32 16, %s20
      %p1271 = scmp.lt.s32.totalorder %s1270, 31
      %s1272 = scalar_select %p1271, %s1270, 31
      %s1273 = smul.addr %s1272, 8
      %s1274 = scalar_lea.vmem %s7, %s1273
      %s1275 = smul.u32 16, %s20
      %p1276 = scmp.lt.s32.totalorder %s1275, 31
      %s1277 = scalar_select %p1276, %s1275, 31
      %s1278 = smul.addr %s1277, 8
      %s1279 = scalar_lea.vmem %s8, %s1278
      // Predicated region
      $region45: #{tpu_custom_call.1} parent=43 // pred_check
        %p1280 = pneg %p169
      $region46: #{tpu_custom_call.1} parent=43 // pred_check_branch
        %1282 = sbr.rel (%p1280) target = $region48
      $region47: #{tpu_custom_call.1} parent=43 // pred_region
        %s1283 = smul.u32 16, %s20
      $region48: #{tpu_custom_call.1} parent=43 // pred_fallthru
        _
      // Predicated region
      $region49: #{tpu_custom_call.1} parent=43 // pred_check
        %p1284 = pneg %p195
      $region50: #{tpu_custom_call.1} parent=43 // pred_check_branch
        %1286 = sbr.rel (%p1284) target = $region52
      $region51: #{tpu_custom_call.1} parent=43 // pred_region
        %s1287 = smul.u32 16, %s20
      $region52: #{tpu_custom_call.1} parent=43 // pred_fallthru
        _
      // Predicated region
      $region53: #{tpu_custom_call.1} parent=43 // pred_check
        %p1288 = pneg %p221
      $region54: #{tpu_custom_call.1} parent=43 // pred_check_branch
        %1290 = sbr.rel (%p1288) target = $region56
      $region55: #{tpu_custom_call.1} parent=43 // pred_region
        %s1291 = smul.u32 16, %s20
      $region56: #{tpu_custom_call.1} parent=43 // pred_fallthru
        _
    $region44: #{tpu_custom_call.1} parent=5 // pred_fallthru
      _
    %p1292 = scmp.le.s32.totalorder 2, %s15
    // Predicated region
    $region57: #{tpu_custom_call.1} parent=5 // pred_check
      %p1293 = pneg %p1292
    $region58: #{tpu_custom_call.1} parent=5 // pred_check_branch
      %1295 = sbr.rel (%p1293) target = $region60
    $region59: #{tpu_custom_call.1} parent=5 // pred_region
      %s1296 = ssub.s32 %s15, 2
      // Predicated region
      $region61: #{tpu_custom_call.1} parent=59 // pred_check
        %p1297 = pneg %p175
      $region62: #{tpu_custom_call.1} parent=59 // pred_check_branch
        %1299 = sbr.rel (%p1297) target = $region64
      $region63: #{tpu_custom_call.1} parent=59 // pred_region
        %s1300 = smul.u32 16, %s21
        %p1301 = scmp.lt.s32.totalorder %s1300, 31
        %s1302 = scalar_select %p1301, %s1300, 31
        %s1303 = smul.addr %s1302, 8
        %s1304 = scalar_lea.vmem %s6, %s1303
      $region64: #{tpu_custom_call.1} parent=59 // pred_fallthru
        _
      // Predicated region
      $region65: #{tpu_custom_call.1} parent=59 // pred_check
        %p1305 = pneg %p201
      $region66: #{tpu_custom_call.1} parent=59 // pred_check_branch
        %1307 = sbr.rel (%p1305) target = $region68
      $region67: #{tpu_custom_call.1} parent=59 // pred_region
        %s1308 = smul.u32 16, %s21
        %p1309 = scmp.lt.s32.totalorder %s1308, 31
        %s1310 = scalar_select %p1309, %s1308, 31
        %s1311 = smul.addr %s1310, 8
        %s1312 = scalar_lea.vmem %s7, %s1311
      $region68: #{tpu_custom_call.1} parent=59 // pred_fallthru
        _
      // Predicated region
      $region69: #{tpu_custom_call.1} parent=59 // pred_check
        %p1313 = pneg %p227
      $region70: #{tpu_custom_call.1} parent=59 // pred_check_branch
        %1315 = sbr.rel (%p1313) target = $region72
      $region71: #{tpu_custom_call.1} parent=59 // pred_region
        %s1316 = smul.u32 16, %s21
        %p1317 = scmp.lt.s32.totalorder %s1316, 31
        %s1318 = scalar_select %p1317, %s1316, 31
        %s1319 = smul.addr %s1318, 8
        %s1320 = scalar_lea.vmem %s8, %s1319
      $region72: #{tpu_custom_call.1} parent=59 // pred_fallthru
        _
    $region60: #{tpu_custom_call.1} parent=5 // pred_fallthru
      _
  $region6: #{tpu_custom_call.1} parent=0 // loop_footer
    %s19 = sadd.s32 1, %s15
  $region7: #{tpu_custom_call.1} parent=0 // loop_footer_branch
    %14 = sbr.rel target = $region3
  $region8: #{tpu_custom_call.1} parent=0 // loop_exit
    _

</llo_original>
